<compile_context>
chip_gen: v5e
topology: v5e:2x2
jax: 0.10.0
libtpu: 0.0.40
codegen_flags: <defaults>
</compile_context>

<pallas_src>
import functools

import jax
import jax.numpy as jnp
from jax.experimental import pallas as pl
from jax.experimental.pallas import tpu as pltpu


def _round_up(a, b):
    return ((a + b - 1) // b) * b


# ----------------------------- Pallas kernel --------------------------------
def global_sa_kernel(batch_ref, feats_ref, w1_ref, b1_ref, w2_ref, b2_ref,
                     o_ref, *, num_batches):
    # batch_ref: (tm, 1) i32   feats_ref: (tm, Din) f32
    # o_ref:     (B_pad, H) f32 -- resident across the whole grid (accumulator).
    @pl.when(pl.program_id(0) == 0)
    def _init():
        o_ref[...] = jnp.zeros_like(o_ref)

    f = feats_ref[...]
    h = jnp.dot(f, w1_ref[...], preferred_element_type=jnp.float32) + b1_ref[...]
    h = jnp.maximum(h, 0.0)                                   # ReLU
    h = jnp.dot(h, w2_ref[...], preferred_element_type=jnp.float32) + b2_ref[...]
    h = jnp.maximum(h, 0.0)                                   # ReLU -> h >= 0

    bids = batch_ref[...]                                     # (tm, 1) i32
    # Static loop over the (small) number of batches: one masked sublane-reduce per
    # batch. Padded rows carry batch id -1, match nothing, and the 0.0 fill is safe
    # because h >= 0 and every real batch is non-empty.
    for bi in range(num_batches):
        sel = bids == bi                                              # (tm, 1)
        contrib = jnp.max(jnp.where(sel, h, 0.0), axis=0, keepdims=True)  # (1, H)
        o_ref[pl.ds(bi, 1), :] = jnp.maximum(o_ref[pl.ds(bi, 1), :], contrib)


# ------------------------------- wrapper -------------------------------------
def global_sa_pallas(x, pos, batch, w1, b1, w2, b2, *, num_batches, tm=512):
    # concat + flatten happen in the wrapper (free XLA ops, contiguous DMA source).
    feats = jnp.concatenate([x, pos], axis=-1).astype(jnp.float32)     # [N, Din]
    n, din = feats.shape
    h1 = w1.shape[1]
    h2 = w2.shape[1]

    # pad point count to a multiple of the (large) tile; padded rows get batch = -1
    m_pad = _round_up(n, tm)
    if m_pad != n:
        feats = jnp.pad(feats, ((0, m_pad - n), (0, 0)))
        batch = jnp.pad(batch, (0, m_pad - n), constant_values=-1)
    batch2d = batch.astype(jnp.int32)[:, None]                         # [m_pad, 1]

    b_pad = _round_up(max(num_batches, 8), 8)                          # sublane-aligned
    grid = (m_pad // tm,)

    kernel = functools.partial(global_sa_kernel, num_batches=num_batches)

    flops = 2 * m_pad * (din * h1 + h1 * h2)
    bytes_accessed = 4 * (m_pad * din + m_pad
                          + w1.size + b1.size + w2.size + b2.size
                          + b_pad * h2)

    out = pl.pallas_call(
        kernel,
        out_shape=jax.ShapeDtypeStruct((b_pad, h2), jnp.float32),
        grid_spec=pltpu.PrefetchScalarGridSpec(
            num_scalar_prefetch=0,
            grid=grid,
            in_specs=[
                pl.BlockSpec((tm, 1), lambda i: (i, 0)),       # batch ids
                pl.BlockSpec((tm, din), lambda i: (i, 0)),     # feats slab
                pl.BlockSpec(w1.shape, lambda i: (0, 0)),
                pl.BlockSpec(b1.shape, lambda i: (0, 0)),
                pl.BlockSpec(w2.shape, lambda i: (0, 0)),
                pl.BlockSpec(b2.shape, lambda i: (0, 0)),
            ],
            # constant index_map => output block stays resident in VMEM across the
            # whole grid and is written back to HBM exactly once.
            out_specs=pl.BlockSpec((b_pad, h2), lambda i: (0, 0)),
        ),
        compiler_params=pltpu.CompilerParams(
            dimension_semantics=("arbitrary",),   # reduction axis (accumulator)
            vmem_limit_bytes=32 * 1024 * 1024,    # safe on v5e/v6e/v7x
        ),
        cost_estimate=pl.CostEstimate(
            flops=flops, transcendentals=0, bytes_accessed=bytes_accessed),
    )(batch2d, feats, w1, b1, w2, b2)

    x_out = out[:num_batches]
    # trivial glue of the module's epilogue (no kernel needed)
    pos_out = jnp.zeros((num_batches, 3), pos.dtype)
    batch_out = jnp.arange(num_batches, dtype=jnp.int32)
    return x_out, pos_out, batch_out


# ------------------------------ reference ------------------------------------
def global_sa_ref(x, pos, batch, w1, b1, w2, b2, num_batches):
    h = jnp.maximum(jnp.concatenate([x, pos], axis=1) @ w1 + b1, 0.0)
    h = jnp.maximum(h @ w2 + b2, 0.0)
    # global_max_pool; h >= 0 so a 0.0 fill is equivalent to -inf here
    return jnp.stack([jnp.max(jnp.where((batch == bi)[:, None], h, 0.0), axis=0)
                      for bi in range(num_batches)])


# --------------------------------- main ---------------------------------------
if __name__ == "__main__":
    key = jax.random.PRNGKey(0)
    k_pos, k_x, k_w1, k_b1, k_w2, k_b2 = jax.random.split(key, 6)

    # small shapes: 2 batches x 32 points, 3-D positions, 4 input features
    per_batch = (32, 32)
    B = len(per_batch)
    N = sum(per_batch)
    C = 4
    H1, H2 = 64, 128                      # lane-dense final width

    pos = jax.random.uniform(k_pos, (N, 3), jnp.float32)
    x = jax.random.normal(k_x, (N, C), jnp.float32)
    batch = jnp.concatenate(
        [jnp.full((c,), i, jnp.int32) for i, c in enumerate(per_batch)])

    # nn = Seq(Lin(C+3, H1), ReLU, Lin(H1, H2), ReLU); torch Linear-style init
    din = C + 3

    def lin_init(kw, kb, fan_in, fan_out):
        bound = 1.0 / jnp.sqrt(fan_in)
        w = jax.random.uniform(kw, (fan_in, fan_out), jnp.float32, -bound, bound)
        b = jax.random.uniform(kb, (1, fan_out), jnp.float32, -bound, bound)
        return w, b

    w1, b1 = lin_init(k_w1, k_b1, din, H1)
    w2, b2 = lin_init(k_w2, k_b2, H1, H2)

    x_out, pos_out, batch_out = global_sa_pallas(
        x, pos, batch, w1, b1, w2, b2, num_batches=B)
    jax.block_until_ready((x_out, pos_out, batch_out))

    # cross-check against a plain-JAX reference
    ref = global_sa_ref(x, pos, batch, w1, b1, w2, b2, B)
    assert x_out.shape == (B, H2)
    assert pos_out.shape == (B, 3) and bool(jnp.all(pos_out == 0.0))
    assert bool(jnp.all(batch_out == jnp.arange(B)))
    assert jnp.allclose(x_out, ref, atol=1e-4, rtol=1e-4)

    print("KERNEL_OK")
</pallas_src>

<mosaic_0001>
module attributes {stable_mosaic.version = 11 : i64} {
  func.func @global_sa_kernel(%arg0: i32, %arg1: memref<512x1xi32, #tpu.memory_space<vmem>>, %arg2: memref<512x7xf32, #tpu.memory_space<vmem>>, %arg3: memref<7x64xf32, #tpu.memory_space<vmem>>, %arg4: memref<1x64xf32, #tpu.memory_space<vmem>>, %arg5: memref<64x128xf32, #tpu.memory_space<vmem>>, %arg6: memref<1x128xf32, #tpu.memory_space<vmem>>, %arg7: memref<8x128xf32, #tpu.memory_space<vmem>>) attributes {dimension_semantics = [#tpu.dimension_semantics<arbitrary>], iteration_bounds = array<i64: 1>, scalar_prefetch = 0 : i64, scratch_operands = 0 : i64, tpu.core_type = #tpu.core_type<tc>, window_params = [{transform_indices = @transform_0, window_bounds = array<i64: 512, 1>}, {transform_indices = @transform_1, window_bounds = array<i64: 512, 7>}, {pipeline_mode = #tpu.pipeline_mode<synchronous>, transform_indices = @transform_2, window_bounds = array<i64: 7, 64>}, {pipeline_mode = #tpu.pipeline_mode<synchronous>, transform_indices = @transform_3, window_bounds = array<i64: 1, 64>}, {pipeline_mode = #tpu.pipeline_mode<synchronous>, transform_indices = @transform_4, window_bounds = array<i64: 64, 128>}, {pipeline_mode = #tpu.pipeline_mode<synchronous>, transform_indices = @transform_5, window_bounds = array<i64: 1, 128>}, {pipeline_mode = #tpu.pipeline_mode<synchronous>, transform_indices = @transform_6, window_bounds = array<i64: 8, 128>}]} {
    %c0_i32 = arith.constant 0 : i32
    %0 = arith.cmpi eq, %arg0, %c0_i32 : i32
    %1 = arith.extui %0 : i1 to i32
    %c0_i32_0 = arith.constant 0 : i32
    %2 = arith.cmpi ne, %1, %c0_i32_0 : i32
    scf.if %2 {
      %cst_27 = arith.constant 0.000000e+00 : f32
      %41 = vector.broadcast %cst_27 : f32 to vector<8x128xf32>
      %c0_28 = arith.constant 0 : index
      %c0_29 = arith.constant 0 : index
      %42 = vector.load %arg7[%c0_28, %c0_29] : memref<8x128xf32, #tpu.memory_space<vmem>>, vector<8x128xf32>
      tpu.vector_store %arg7[%c0_28, %c0_29], %41 {strides = array<i32>} : memref<8x128xf32, #tpu.memory_space<vmem>>, vector<8x128xf32>,
    } else {
    }
    %c0 = arith.constant 0 : index
    %c0_1 = arith.constant 0 : index
    %3 = vector.load %arg2[%c0, %c0_1] : memref<512x7xf32, #tpu.memory_space<vmem>>, vector<512x7xf32>
    %c0_2 = arith.constant 0 : index
    %c0_3 = arith.constant 0 : index
    %4 = vector.load %arg3[%c0_2, %c0_3] : memref<7x64xf32, #tpu.memory_space<vmem>>, vector<7x64xf32>
    %cst = arith.constant dense<0.000000e+00> : vector<512x64xf32>
    %5 = tpu.matmul %3, %4, %cst {dimension_numbers = #tpu.dot_dimension_numbers<[1], [0], [0], [1], [0, 0, 1, 1], [], []>} : vector<512x7xf32>, vector<7x64xf32>, vector<512x64xf32> -> vector<512x64xf32>
    %c0_4 = arith.constant 0 : index
    %c0_5 = arith.constant 0 : index
    %6 = vector.load %arg4[%c0_4, %c0_5] : memref<1x64xf32, #tpu.memory_space<vmem>>, vector<1x64xf32>
    %7 = vector.broadcast %6 : vector<1x64xf32> to vector<512x64xf32>
    %8 = arith.addf %5, %7 : vector<512x64xf32>
    %cst_6 = arith.constant 0.000000e+00 : f32
    %9 = vector.broadcast %cst_6 : f32 to vector<512x64xf32>
    %10 = arith.maximumf %8, %9 : vector<512x64xf32>
    %c0_7 = arith.constant 0 : index
    %c0_8 = arith.constant 0 : index
    %11 = vector.load %arg5[%c0_7, %c0_8] : memref<64x128xf32, #tpu.memory_space<vmem>>, vector<64x128xf32>
    %cst_9 = arith.constant dense<0.000000e+00> : vector<512x128xf32>
    %12 = tpu.matmul %10, %11, %cst_9 {dimension_numbers = #tpu.dot_dimension_numbers<[1], [0], [0], [1], [0, 0, 1, 1], [], []>} : vector<512x64xf32>, vector<64x128xf32>, vector<512x128xf32> -> vector<512x128xf32>
    %c0_10 = arith.constant 0 : index
    %c0_11 = arith.constant 0 : index
    %13 = vector.load %arg6[%c0_10, %c0_11] : memref<1x128xf32, #tpu.memory_space<vmem>>, vector<1x128xf32>
    %14 = vector.broadcast %13 : vector<1x128xf32> to vector<512x128xf32>
    %15 = arith.addf %12, %14 : vector<512x128xf32>
    %cst_12 = arith.constant 0.000000e+00 : f32
    %16 = vector.broadcast %cst_12 : f32 to vector<512x128xf32>
    %17 = arith.maximumf %15, %16 : vector<512x128xf32>
    %c0_13 = arith.constant 0 : index
    %c0_14 = arith.constant 0 : index
    %18 = vector.load %arg1[%c0_13, %c0_14] : memref<512x1xi32, #tpu.memory_space<vmem>>, vector<512x1xi32>
    %c0_i32_15 = arith.constant 0 : i32
    %19 = vector.broadcast %c0_i32_15 : i32 to vector<512x1xi32>
    %20 = arith.cmpi eq, %18, %19 : vector<512x1xi32>
    %cst_16 = arith.constant 0.000000e+00 : f32
    %21 = vector.shape_cast %20 : vector<512x1xi1> to vector<512x1xi1>
    %22 = vector.broadcast %21 : vector<512x1xi1> to vector<512x128xi1>
    %23 = vector.broadcast %cst_16 : f32 to vector<512x128xf32>
    %24 = arith.select %22, %17, %23 : vector<512x128xi1>, vector<512x128xf32>
    %cst_17 = arith.constant dense<0xFF800000> : vector<128xf32>
    %25 = vector.multi_reduction <maximumf>, %24, %cst_17 [0] : vector<512x128xf32> to vector<128xf32>
    %26 = vector.shape_cast %25 : vector<128xf32> to vector<1x128xf32>
    %c0_18 = arith.constant 0 : index
    %c0_19 = arith.constant 0 : index
    %27 = vector.load %arg7[%c0_18, %c0_19] : memref<8x128xf32, #tpu.memory_space<vmem>>, vector<1x128xf32>
    %28 = arith.maximumf %27, %26 : vector<1x128xf32>
    %c0_20 = arith.constant 0 : index
    %c0_21 = arith.constant 0 : index
    %29 = vector.load %arg7[%c0_20, %c0_21] : memref<8x128xf32, #tpu.memory_space<vmem>>, vector<1x128xf32>
    tpu.vector_store %arg7[%c0_20, %c0_21], %28 {strides = array<i32>} : memref<8x128xf32, #tpu.memory_space<vmem>>, vector<1x128xf32>,
    %c1_i32 = arith.constant 1 : i32
    %30 = vector.broadcast %c1_i32 : i32 to vector<512x1xi32>
    %31 = arith.cmpi eq, %18, %30 : vector<512x1xi32>
    %cst_22 = arith.constant 0.000000e+00 : f32
    %32 = vector.shape_cast %31 : vector<512x1xi1> to vector<512x1xi1>
    %33 = vector.broadcast %32 : vector<512x1xi1> to vector<512x128xi1>
    %34 = vector.broadcast %cst_22 : f32 to vector<512x128xf32>
    %35 = arith.select %33, %17, %34 : vector<512x128xi1>, vector<512x128xf32>
    %cst_23 = arith.constant dense<0xFF800000> : vector<128xf32>
    %36 = vector.multi_reduction <maximumf>, %35, %cst_23 [0] : vector<512x128xf32> to vector<128xf32>
    %37 = vector.shape_cast %36 : vector<128xf32> to vector<1x128xf32>
    %c1 = arith.constant 1 : index
    %c0_24 = arith.constant 0 : index
    %38 = vector.load %arg7[%c1, %c0_24] : memref<8x128xf32, #tpu.memory_space<vmem>>, vector<1x128xf32>
    %39 = arith.maximumf %38, %37 : vector<1x128xf32>
    %c1_25 = arith.constant 1 : index
    %c0_26 = arith.constant 0 : index
    %40 = vector.load %arg7[%c1_25, %c0_26] : memref<8x128xf32, #tpu.memory_space<vmem>>, vector<1x128xf32>
    tpu.vector_store %arg7[%c1_25, %c0_26], %39 {strides = array<i32>} : memref<8x128xf32, #tpu.memory_space<vmem>>, vector<1x128xf32>,
    return
  }
  func.func @transform_0(%arg0: i32) -> (i32, i32) {
    %c0_i32 = arith.constant 0 : i32
    %c0_i32_0 = arith.constant 0 : i32
    return %arg0, %c0_i32 : i32, i32
  }
  func.func @transform_1(%arg0: i32) -> (i32, i32) {
    %c0_i32 = arith.constant 0 : i32
    %c0_i32_0 = arith.constant 0 : i32
    return %arg0, %c0_i32 : i32, i32
  }
  func.func @transform_2(%arg0: i32) -> (i32, i32) {
    %c0_i32 = arith.constant 0 : i32
    %c0_i32_0 = arith.constant 0 : i32
    %c0_i32_1 = arith.constant 0 : i32
    return %c0_i32, %c0_i32_0 : i32, i32
  }
  func.func @transform_3(%arg0: i32) -> (i32, i32) {
    %c0_i32 = arith.constant 0 : i32
    %c0_i32_0 = arith.constant 0 : i32
    %c0_i32_1 = arith.constant 0 : i32
    return %c0_i32, %c0_i32_0 : i32, i32
  }
  func.func @transform_4(%arg0: i32) -> (i32, i32) {
    %c0_i32 = arith.constant 0 : i32
    %c0_i32_0 = arith.constant 0 : i32
    %c0_i32_1 = arith.constant 0 : i32
    return %c0_i32, %c0_i32_0 : i32, i32
  }
  func.func @transform_5(%arg0: i32) -> (i32, i32) {
    %c0_i32 = arith.constant 0 : i32
    %c0_i32_0 = arith.constant 0 : i32
    %c0_i32_1 = arith.constant 0 : i32
    return %c0_i32, %c0_i32_0 : i32, i32
  }
  func.func @transform_6(%arg0: i32) -> (i32, i32) {
    %c0_i32 = arith.constant 0 : i32
    %c0_i32_0 = arith.constant 0 : i32
    %c0_i32_1 = arith.constant 0 : i32
    return %c0_i32, %c0_i32_0 : i32, i32
  }
}

</mosaic_0001>

<llo_original>
// kernel: tpu_custom_call.1
$region0: #{tpu_custom_call.1}
  #allocation0 [shape = 'u32[]', space=smem, size = 0x4, offset = 0x4, fixed_abs, tag = 'smem constant byte address 0x4 - core index']
  #allocation1 [shape = 'u32[72,128]{1,0:T(1,128)}', space=vmem, size = 0x9000, scoped, tag = 'internal scratch']
  %s0 = inlined_call_operand.vmem [shape: s32[512,1], index: 0, kind: input, shape index: {}]
  %s1 = inlined_call_operand.vmem [shape: f32[512,7], index: 1, kind: input, shape index: {}]
  %s2 = inlined_call_operand.vmem [shape: f32[7,64], index: 2, kind: input, shape index: {}]
  %s3 = inlined_call_operand.vmem [shape: f32[1,64], index: 3, kind: input, shape index: {}]
  %s4 = inlined_call_operand.vmem [shape: f32[64,128], index: 4, kind: input, shape index: {}]
  %s5 = inlined_call_operand.vmem [shape: f32[1,128], index: 5, kind: input, shape index: {}]
  %s6 = inlined_call_operand.hbm [shape: f32[8,128], index: 6, kind: output, shape index: {}]
  %s7 = sld [smem:[#allocation0]]
  $region38: #{tpu_custom_call.1} parent=0
    _
  %s9 = ssub.s32 1, %s7
  %s10 = scalar_select 0, %s9, %s7
  $region1: #{tpu_custom_call.1} parent=0
    #allocation2 [shape = 'u8[4096]{0}', space=vmem, size = 0x1000, scoped, tag = 'output window, operand 0, single buffered']
    #allocation3 [shape = 's32[1]{0}', space=sflag, size = 0x4, scoped, tag = 'scoped memory for tpu_custom_call.1']
    %11 = vsyncpa [#allocation3], 0
    // Predicated region
    $region2: #{tpu_custom_call.1} parent=1 // pred_check
      _
    $region3: #{tpu_custom_call.1} parent=1 // pred_check_branch
      %13 = sbr.rel (0) target = $region5
    $region4: #{tpu_custom_call.1} parent=1 // pred_region
      _
    $region5: #{tpu_custom_call.1} parent=1 // pred_fallthru
      _
    // Predicated region
    $region6: #{tpu_custom_call.1} parent=1 // pred_check
      _
    $region7: #{tpu_custom_call.1} parent=1 // pred_check_branch
      %15 = sbr.rel (0) target = $region9
    $region8: #{tpu_custom_call.1} parent=1 // pred_region
      _
    $region9: #{tpu_custom_call.1} parent=1 // pred_fallthru
      _
    // Predicated region
    $region10: #{tpu_custom_call.1} parent=1 // pred_check
      _
    $region11: #{tpu_custom_call.1} parent=1 // pred_check_branch
      %17 = sbr.rel (0) target = $region13
    $region12: #{tpu_custom_call.1} parent=1 // pred_region
      _
    $region13: #{tpu_custom_call.1} parent=1 // pred_fallthru
      _
    // Predicated region
    $region14: #{tpu_custom_call.1} parent=1 // pred_check
      _
    $region15: #{tpu_custom_call.1} parent=1 // pred_check_branch
      %19 = sbr.rel (0) target = $region17
    $region16: #{tpu_custom_call.1} parent=1 // pred_region
      _
    $region17: #{tpu_custom_call.1} parent=1 // pred_fallthru
      _
    // Predicated region
    $region18: #{tpu_custom_call.1} parent=1 // pred_check
      _
    $region19: #{tpu_custom_call.1} parent=1 // pred_check_branch
      %21 = sbr.rel (0) target = $region21
    $region20: #{tpu_custom_call.1} parent=1 // pred_region
      _
    $region21: #{tpu_custom_call.1} parent=1 // pred_fallthru
      _
    // Predicated region
    $region22: #{tpu_custom_call.1} parent=1 // pred_check
      _
    $region23: #{tpu_custom_call.1} parent=1 // pred_check_branch
      %23 = sbr.rel (0) target = $region25
    $region24: #{tpu_custom_call.1} parent=1 // pred_region
      _
    $region25: #{tpu_custom_call.1} parent=1 // pred_fallthru
      _
    %p24 = scmp.eq.s32.totalorder 0, 0
    // Predicated region
    $region26: #{tpu_custom_call.1} parent=1 // pred_check
      %p25 = pneg %p24
    $region27: #{tpu_custom_call.1} parent=1 // pred_check_branch
      %27 = sbr.rel (%p25) target = $region29
    $region28: #{tpu_custom_call.1} parent=1 // pred_region
      %28 = vst [vmem:[#allocation2] sm:$0xff] 0.0
    $region29: #{tpu_custom_call.1} parent=1 // pred_fallthru
      _
    %v29 = vld [vmem:[%s1] sm:$0xff]
    %v30 = vld [vmem:[%s1 + $0x8] sm:$0xff]
    %v31 = vld [vmem:[%s1 + $0x10] sm:$0xff]
    %v32 = vld [vmem:[%s1 + $0x18] sm:$0xff]
    %v33 = vld [vmem:[%s1 + $0x20] sm:$0xff]
    %v34 = vld [vmem:[%s1 + $0x28] sm:$0xff]
    %v35 = vld [vmem:[%s1 + $0x30] sm:$0xff]
    %v36 = vld [vmem:[%s1 + $0x38] sm:$0xff]
    %v37 = vld [vmem:[%s1 + $0x40] sm:$0xff]
    %v38 = vld [vmem:[%s1 + $0x48] sm:$0xff]
    %v39 = vld [vmem:[%s1 + $0x50] sm:$0xff]
    %v40 = vld [vmem:[%s1 + $0x58] sm:$0xff]
    %v41 = vld [vmem:[%s1 + $0x60] sm:$0xff]
    %v42 = vld [vmem:[%s1 + $0x68] sm:$0xff]
    %v43 = vld [vmem:[%s1 + $0x70] sm:$0xff]
    %v44 = vld [vmem:[%s1 + $0x78] sm:$0xff]
    %v45 = vld [vmem:[%s1 + $0x80] sm:$0xff]
    %v46 = vld [vmem:[%s1 + $0x88] sm:$0xff]
    %v47 = vld [vmem:[%s1 + $0x90] sm:$0xff]
    %v48 = vld [vmem:[%s1 + $0x98] sm:$0xff]
    %v49 = vld [vmem:[%s1 + $0xa0] sm:$0xff]
    %v50 = vld [vmem:[%s1 + $0xa8] sm:$0xff]
    %v51 = vld [vmem:[%s1 + $0xb0] sm:$0xff]
    %v52 = vld [vmem:[%s1 + $0xb8] sm:$0xff]
    %v53 = vld [vmem:[%s1 + $0xc0] sm:$0xff]
    %v54 = vld [vmem:[%s1 + $0xc8] sm:$0xff]
    %v55 = vld [vmem:[%s1 + $0xd0] sm:$0xff]
    %v56 = vld [vmem:[%s1 + $0xd8] sm:$0xff]
    %v57 = vld [vmem:[%s1 + $0xe0] sm:$0xff]
    %v58 = vld [vmem:[%s1 + $0xe8] sm:$0xff]
    %v59 = vld [vmem:[%s1 + $0xf0] sm:$0xff]
    %v60 = vld [vmem:[%s1 + $0xf8] sm:$0xff]
    %v61 = vld [vmem:[%s1 + $0x100] sm:$0xff]
    %v62 = vld [vmem:[%s1 + $0x108] sm:$0xff]
    %v63 = vld [vmem:[%s1 + $0x110] sm:$0xff]
    %v64 = vld [vmem:[%s1 + $0x118] sm:$0xff]
    %v65 = vld [vmem:[%s1 + $0x120] sm:$0xff]
    %v66 = vld [vmem:[%s1 + $0x128] sm:$0xff]
    %v67 = vld [vmem:[%s1 + $0x130] sm:$0xff]
    %v68 = vld [vmem:[%s1 + $0x138] sm:$0xff]
    %v69 = vld [vmem:[%s1 + $0x140] sm:$0xff]
    %v70 = vld [vmem:[%s1 + $0x148] sm:$0xff]
    %v71 = vld [vmem:[%s1 + $0x150] sm:$0xff]
    %v72 = vld [vmem:[%s1 + $0x158] sm:$0xff]
    %v73 = vld [vmem:[%s1 + $0x160] sm:$0xff]
    %v74 = vld [vmem:[%s1 + $0x168] sm:$0xff]
    %v75 = vld [vmem:[%s1 + $0x170] sm:$0xff]
    %v76 = vld [vmem:[%s1 + $0x178] sm:$0xff]
    %v77 = vld [vmem:[%s1 + $0x180] sm:$0xff]
    %v78 = vld [vmem:[%s1 + $0x188] sm:$0xff]
    %v79 = vld [vmem:[%s1 + $0x190] sm:$0xff]
    %v80 = vld [vmem:[%s1 + $0x198] sm:$0xff]
    %v81 = vld [vmem:[%s1 + $0x1a0] sm:$0xff]
    %v82 = vld [vmem:[%s1 + $0x1a8] sm:$0xff]
    %v83 = vld [vmem:[%s1 + $0x1b0] sm:$0xff]
    %v84 = vld [vmem:[%s1 + $0x1b8] sm:$0xff]
    %v85 = vld [vmem:[%s1 + $0x1c0] sm:$0xff]
    %v86 = vld [vmem:[%s1 + $0x1c8] sm:$0xff]
    %v87 = vld [vmem:[%s1 + $0x1d0] sm:$0xff]
    %v88 = vld [vmem:[%s1 + $0x1d8] sm:$0xff]
    %v89 = vld [vmem:[%s1 + $0x1e0] sm:$0xff]
    %v90 = vld [vmem:[%s1 + $0x1e8] sm:$0xff]
    %v91 = vld [vmem:[%s1 + $0x1f0] sm:$0xff]
    %v92 = vld [vmem:[%s1 + $0x1f8] sm:$0xff]
    %v93 = vld [vmem:[%s2] sm:$0x7f]
    %v94 = vld [vmem:[%s3] sm:$0x1]
    %v96 = vperm.slane %v94, 0
    %vm98 = vcmask 56320
    %v100 = vsel %vm98, %v29, 0
    %v103 = vsel %vm98, %v30, 0
    %v106 = vsel %vm98, %v31, 0
    %v109 = vsel %vm98, %v32, 0
    %v112 = vsel %vm98, %v33, 0
    %v115 = vsel %vm98, %v34, 0
    %v118 = vsel %vm98, %v35, 0
    %v121 = vsel %vm98, %v36, 0
    %v124 = vsel %vm98, %v37, 0
    %v127 = vsel %vm98, %v38, 0
    %v130 = vsel %vm98, %v39, 0
    %v133 = vsel %vm98, %v40, 0
    %v136 = vsel %vm98, %v41, 0
    %v139 = vsel %vm98, %v42, 0
    %v142 = vsel %vm98, %v43, 0
    %v145 = vsel %vm98, %v44, 0
    %v148 = vsel %vm98, %v45, 0
    %v151 = vsel %vm98, %v46, 0
    %v154 = vsel %vm98, %v47, 0
    %v157 = vsel %vm98, %v48, 0
    %v160 = vsel %vm98, %v49, 0
    %v163 = vsel %vm98, %v50, 0
    %v166 = vsel %vm98, %v51, 0
    %v169 = vsel %vm98, %v52, 0
    %v172 = vsel %vm98, %v53, 0
    %v175 = vsel %vm98, %v54, 0
    %v178 = vsel %vm98, %v55, 0
    %v181 = vsel %vm98, %v56, 0
    %v184 = vsel %vm98, %v57, 0
    %v187 = vsel %vm98, %v58, 0
    %v190 = vsel %vm98, %v59, 0
    %v193 = vsel %vm98, %v60, 0
    %v196 = vsel %vm98, %v61, 0
    %v199 = vsel %vm98, %v62, 0
    %v202 = vsel %vm98, %v63, 0
    %v205 = vsel %vm98, %v64, 0
    %v208 = vsel %vm98, %v65, 0
    %v211 = vsel %vm98, %v66, 0
    %v214 = vsel %vm98, %v67, 0
    %v217 = vsel %vm98, %v68, 0
    %v220 = vsel %vm98, %v69, 0
    %v223 = vsel %vm98, %v70, 0
    %v226 = vsel %vm98, %v71, 0
    %v229 = vsel %vm98, %v72, 0
    %v232 = vsel %vm98, %v73, 0
    %v235 = vsel %vm98, %v74, 0
    %v238 = vsel %vm98, %v75, 0
    %v241 = vsel %vm98, %v76, 0
    %v244 = vsel %vm98, %v77, 0
    %v247 = vsel %vm98, %v78, 0
    %v250 = vsel %vm98, %v79, 0
    %v253 = vsel %vm98, %v80, 0
    %v256 = vsel %vm98, %v81, 0
    %v259 = vsel %vm98, %v82, 0
    %v262 = vsel %vm98, %v83, 0
    %v265 = vsel %vm98, %v84, 0
    %v268 = vsel %vm98, %v85, 0
    %v271 = vsel %vm98, %v86, 0
    %v274 = vsel %vm98, %v87, 0
    %v277 = vsel %vm98, %v88, 0
    %v280 = vsel %vm98, %v89, 0
    %v283 = vsel %vm98, %v90, 0
    %v286 = vsel %vm98, %v91, 0
    %v289 = vsel %vm98, %v92, 0
    %vm291 = vcmask 1046528
    %v293 = vsel %vm291, %v93, 0
    %295 = vmatpush.msra.mxu0 0.0
    %296 = vmatpush.msra.mxu0 0.0
    %297 = vmatpush.msra.mxu0 0.0
    %298 = vmatpush.msra.mxu0 0.0
    %299 = vmatpush.msra.mxu0 0.0
    %300 = vmatpush.msra.mxu0 0.0
    %301 = vmatpush.msra.mxu0 0.0
    %302 = vmatpush.msra.mxu0 0.0
    %303 = vmatpush.msra.mxu0 0.0
    %304 = vmatpush.msra.mxu0 0.0
    %305 = vmatpush.msra.mxu0 0.0
    %306 = vmatpush.msra.mxu0 0.0
    %307 = vmatpush.msra.mxu0 0.0
    %308 = vmatpush.msra.mxu0 0.0
    %309 = vmatpush.msra.mxu0 0.0
    %310 = vmatpush.msra.mxu0 %v293
    %311 = vmatmul.f32.gmra.mxu0 %v100
    %v312 = vpop.f32.mrf.mxu0
    %v313 = vadd.f32 %v96, %v312
    %314 = vmatmul.f32.gmra.mxu0 %v103
    %v315 = vpop.f32.mrf.mxu0
    %v316 = vadd.f32 %v96, %v315
    %317 = vmatmul.f32.gmra.mxu0 %v106
    %v318 = vpop.f32.mrf.mxu0
    %v319 = vadd.f32 %v96, %v318
    %320 = vmatmul.f32.gmra.mxu0 %v109
    %v321 = vpop.f32.mrf.mxu0
    %v322 = vadd.f32 %v96, %v321
    %323 = vmatmul.f32.gmra.mxu0 %v112
    %v324 = vpop.f32.mrf.mxu0
    %v325 = vadd.f32 %v96, %v324
    %326 = vmatmul.f32.gmra.mxu0 %v115
    %v327 = vpop.f32.mrf.mxu0
    %v328 = vadd.f32 %v96, %v327
    %329 = vmatmul.f32.gmra.mxu0 %v118
    %v330 = vpop.f32.mrf.mxu0
    %v331 = vadd.f32 %v96, %v330
    %332 = vmatmul.f32.gmra.mxu0 %v121
    %v333 = vpop.f32.mrf.mxu0
    %v334 = vadd.f32 %v96, %v333
    %335 = vmatmul.f32.gmra.mxu0 %v124
    %v336 = vpop.f32.mrf.mxu0
    %v337 = vadd.f32 %v96, %v336
    %338 = vmatmul.f32.gmra.mxu0 %v127
    %v339 = vpop.f32.mrf.mxu0
    %v340 = vadd.f32 %v96, %v339
    %341 = vmatmul.f32.gmra.mxu0 %v130
    %v342 = vpop.f32.mrf.mxu0
    %v343 = vadd.f32 %v96, %v342
    %344 = vmatmul.f32.gmra.mxu0 %v133
    %v345 = vpop.f32.mrf.mxu0
    %v346 = vadd.f32 %v96, %v345
    %347 = vmatmul.f32.gmra.mxu0 %v136
    %v348 = vpop.f32.mrf.mxu0
    %v349 = vadd.f32 %v96, %v348
    %350 = vmatmul.f32.gmra.mxu0 %v139
    %v351 = vpop.f32.mrf.mxu0
    %v352 = vadd.f32 %v96, %v351
    %353 = vmatmul.f32.gmra.mxu0 %v142
    %v354 = vpop.f32.mrf.mxu0
    %v355 = vadd.f32 %v96, %v354
    %356 = vmatmul.f32.gmra.mxu0 %v145
    %v357 = vpop.f32.mrf.mxu0
    %v358 = vadd.f32 %v96, %v357
    %359 = vmatmul.f32.gmra.mxu0 %v148
    %v360 = vpop.f32.mrf.mxu0
    %v361 = vadd.f32 %v96, %v360
    %362 = vmatmul.f32.gmra.mxu0 %v151
    %v363 = vpop.f32.mrf.mxu0
    %v364 = vadd.f32 %v96, %v363
    %365 = vmatmul.f32.gmra.mxu0 %v154
    %v366 = vpop.f32.mrf.mxu0
    %v367 = vadd.f32 %v96, %v366
    %368 = vmatmul.f32.gmra.mxu0 %v157
    %v369 = vpop.f32.mrf.mxu0
    %v370 = vadd.f32 %v96, %v369
    %371 = vmatmul.f32.gmra.mxu0 %v160
    %v372 = vpop.f32.mrf.mxu0
    %v373 = vadd.f32 %v96, %v372
    %374 = vmatmul.f32.gmra.mxu0 %v163
    %v375 = vpop.f32.mrf.mxu0
    %v376 = vadd.f32 %v96, %v375
    %377 = vmatmul.f32.gmra.mxu0 %v166
    %v378 = vpop.f32.mrf.mxu0
    %v379 = vadd.f32 %v96, %v378
    %380 = vmatmul.f32.gmra.mxu0 %v169
    %v381 = vpop.f32.mrf.mxu0
    %v382 = vadd.f32 %v96, %v381
    %383 = vmatmul.f32.gmra.mxu0 %v172
    %v384 = vpop.f32.mrf.mxu0
    %v385 = vadd.f32 %v96, %v384
    %386 = vmatmul.f32.gmra.mxu0 %v175
    %v387 = vpop.f32.mrf.mxu0
    %v388 = vadd.f32 %v96, %v387
    %389 = vmatmul.f32.gmra.mxu0 %v178
    %v390 = vpop.f32.mrf.mxu0
    %v391 = vadd.f32 %v96, %v390
    %392 = vmatmul.f32.gmra.mxu0 %v181
    %v393 = vpop.f32.mrf.mxu0
    %v394 = vadd.f32 %v96, %v393
    %395 = vmatmul.f32.gmra.mxu0 %v184
    %v396 = vpop.f32.mrf.mxu0
    %v397 = vadd.f32 %v96, %v396
    %398 = vmatmul.f32.gmra.mxu0 %v187
    %v399 = vpop.f32.mrf.mxu0
    %v400 = vadd.f32 %v96, %v399
    %401 = vmatmul.f32.gmra.mxu0 %v190
    %v402 = vpop.f32.mrf.mxu0
    %v403 = vadd.f32 %v96, %v402
    %404 = vmatmul.f32.gmra.mxu0 %v193
    %v405 = vpop.f32.mrf.mxu0
    %v406 = vadd.f32 %v96, %v405
    %407 = vmatmul.f32.gmra.mxu0 %v196
    %v408 = vpop.f32.mrf.mxu0
    %v409 = vadd.f32 %v96, %v408
    %410 = vmatmul.f32.gmra.mxu0 %v199
    %v411 = vpop.f32.mrf.mxu0
    %v412 = vadd.f32 %v96, %v411
    %413 = vmatmul.f32.gmra.mxu0 %v202
    %v414 = vpop.f32.mrf.mxu0
    %v415 = vadd.f32 %v96, %v414
    %416 = vmatmul.f32.gmra.mxu0 %v205
    %v417 = vpop.f32.mrf.mxu0
    %v418 = vadd.f32 %v96, %v417
    %419 = vmatmul.f32.gmra.mxu0 %v208
    %v420 = vpop.f32.mrf.mxu0
    %v421 = vadd.f32 %v96, %v420
    %422 = vmatmul.f32.gmra.mxu0 %v211
    %v423 = vpop.f32.mrf.mxu0
    %v424 = vadd.f32 %v96, %v423
    %425 = vmatmul.f32.gmra.mxu0 %v214
    %v426 = vpop.f32.mrf.mxu0
    %v427 = vadd.f32 %v96, %v426
    %428 = vmatmul.f32.gmra.mxu0 %v217
    %v429 = vpop.f32.mrf.mxu0
    %v430 = vadd.f32 %v96, %v429
    %431 = vmatmul.f32.gmra.mxu0 %v220
    %v432 = vpop.f32.mrf.mxu0
    %v433 = vadd.f32 %v96, %v432
    %434 = vmatmul.f32.gmra.mxu0 %v223
    %v435 = vpop.f32.mrf.mxu0
    %v436 = vadd.f32 %v96, %v435
    %437 = vmatmul.f32.gmra.mxu0 %v226
    %v438 = vpop.f32.mrf.mxu0
    %v439 = vadd.f32 %v96, %v438
    %440 = vmatmul.f32.gmra.mxu0 %v229
    %v441 = vpop.f32.mrf.mxu0
    %v442 = vadd.f32 %v96, %v441
    %443 = vmatmul.f32.gmra.mxu0 %v232
    %v444 = vpop.f32.mrf.mxu0
    %v445 = vadd.f32 %v96, %v444
    %446 = vmatmul.f32.gmra.mxu0 %v235
    %v447 = vpop.f32.mrf.mxu0
    %v448 = vadd.f32 %v96, %v447
    %449 = vmatmul.f32.gmra.mxu0 %v238
    %v450 = vpop.f32.mrf.mxu0
    %v451 = vadd.f32 %v96, %v450
    %452 = vmatmul.f32.gmra.mxu0 %v241
    %v453 = vpop.f32.mrf.mxu0
    %v454 = vadd.f32 %v96, %v453
    %455 = vmatmul.f32.gmra.mxu0 %v244
    %v456 = vpop.f32.mrf.mxu0
    %v457 = vadd.f32 %v96, %v456
    %458 = vmatmul.f32.gmra.mxu0 %v247
    %v459 = vpop.f32.mrf.mxu0
    %v460 = vadd.f32 %v96, %v459
    %461 = vmatmul.f32.gmra.mxu0 %v250
    %v462 = vpop.f32.mrf.mxu0
    %v463 = vadd.f32 %v96, %v462
    %464 = vmatmul.f32.gmra.mxu0 %v253
    %v465 = vpop.f32.mrf.mxu0
    %v466 = vadd.f32 %v96, %v465
    %467 = vmatmul.f32.gmra.mxu0 %v256
    %v468 = vpop.f32.mrf.mxu0
    %v469 = vadd.f32 %v96, %v468
    %470 = vmatmul.f32.gmra.mxu0 %v259
    %v471 = vpop.f32.mrf.mxu0
    %v472 = vadd.f32 %v96, %v471
    %473 = vmatmul.f32.gmra.mxu0 %v262
    %v474 = vpop.f32.mrf.mxu0
    %v475 = vadd.f32 %v96, %v474
    %476 = vmatmul.f32.gmra.mxu0 %v265
    %v477 = vpop.f32.mrf.mxu0
    %v478 = vadd.f32 %v96, %v477
    %479 = vmatmul.f32.gmra.mxu0 %v268
    %v480 = vpop.f32.mrf.mxu0
    %v481 = vadd.f32 %v96, %v480
    %482 = vmatmul.f32.gmra.mxu0 %v271
    %v483 = vpop.f32.mrf.mxu0
    %v484 = vadd.f32 %v96, %v483
    %485 = vmatmul.f32.gmra.mxu0 %v274
    %v486 = vpop.f32.mrf.mxu0
    %v487 = vadd.f32 %v96, %v486
    %488 = vmatmul.f32.gmra.mxu0 %v277
    %v489 = vpop.f32.mrf.mxu0
    %v490 = vadd.f32 %v96, %v489
    %491 = vmatmul.f32.gmra.mxu0 %v280
    %v492 = vpop.f32.mrf.mxu0
    %v493 = vadd.f32 %v96, %v492
    %494 = vmatmul.f32.gmra.mxu0 %v283
    %v495 = vpop.f32.mrf.mxu0
    %v496 = vadd.f32 %v96, %v495
    %497 = vmatmul.f32.gmra.mxu0 %v286
    %v498 = vpop.f32.mrf.mxu0
    %v499 = vadd.f32 %v96, %v498
    %500 = vmatmul.f32.gmra.mxu0 %v289
    %v501 = vpop.f32.mrf.mxu0
    %v502 = vadd.f32 %v96, %v501
    %503 = vdwg.mxu0
    %v504 = vmax.f32 %v313, 0.0
    %v505 = vmax.f32 %v316, 0.0
    %v506 = vmax.f32 %v319, 0.0
    %v507 = vmax.f32 %v322, 0.0
    %v508 = vmax.f32 %v325, 0.0
    %v509 = vmax.f32 %v328, 0.0
    %v510 = vmax.f32 %v331, 0.0
    %v511 = vmax.f32 %v334, 0.0
    %v512 = vmax.f32 %v337, 0.0
    %v513 = vmax.f32 %v340, 0.0
    %v514 = vmax.f32 %v343, 0.0
    %v515 = vmax.f32 %v346, 0.0
    %v516 = vmax.f32 %v349, 0.0
    %v517 = vmax.f32 %v352, 0.0
    %v518 = vmax.f32 %v355, 0.0
    %v519 = vmax.f32 %v358, 0.0
    %v520 = vmax.f32 %v361, 0.0
    %v521 = vmax.f32 %v364, 0.0
    %v522 = vmax.f32 %v367, 0.0
    %v523 = vmax.f32 %v370, 0.0
    %v524 = vmax.f32 %v373, 0.0
    %v525 = vmax.f32 %v376, 0.0
    %v526 = vmax.f32 %v379, 0.0
    %v527 = vmax.f32 %v382, 0.0
    %v528 = vmax.f32 %v385, 0.0
    %v529 = vmax.f32 %v388, 0.0
    %v530 = vmax.f32 %v391, 0.0
    %v531 = vmax.f32 %v394, 0.0
    %v532 = vmax.f32 %v397, 0.0
    %v533 = vmax.f32 %v400, 0.0
    %v534 = vmax.f32 %v403, 0.0
    %v535 = vmax.f32 %v406, 0.0
    %v536 = vmax.f32 %v409, 0.0
    %v537 = vmax.f32 %v412, 0.0
    %v538 = vmax.f32 %v415, 0.0
    %v539 = vmax.f32 %v418, 0.0
    %v540 = vmax.f32 %v421, 0.0
    %v541 = vmax.f32 %v424, 0.0
    %v542 = vmax.f32 %v427, 0.0
    %v543 = vmax.f32 %v430, 0.0
    %v544 = vmax.f32 %v433, 0.0
    %v545 = vmax.f32 %v436, 0.0
    %v546 = vmax.f32 %v439, 0.0
    %v547 = vmax.f32 %v442, 0.0
    %v548 = vmax.f32 %v445, 0.0
    %v549 = vmax.f32 %v448, 0.0
    %v550 = vmax.f32 %v451, 0.0
    %v551 = vmax.f32 %v454, 0.0
    %v552 = vmax.f32 %v457, 0.0
    %v553 = vmax.f32 %v460, 0.0
    %v554 = vmax.f32 %v463, 0.0
    %v555 = vmax.f32 %v466, 0.0
    %v556 = vmax.f32 %v469, 0.0
    %v557 = vmax.f32 %v472, 0.0
    %v558 = vmax.f32 %v475, 0.0
    %v559 = vmax.f32 %v478, 0.0
    %v560 = vmax.f32 %v481, 0.0
    %v561 = vmax.f32 %v484, 0.0
    %v562 = vmax.f32 %v487, 0.0
    %v563 = vmax.f32 %v490, 0.0
    %v564 = vmax.f32 %v493, 0.0
    %v565 = vmax.f32 %v496, 0.0
    %v566 = vmax.f32 %v499, 0.0
    %v567 = vmax.f32 %v502, 0.0
    %v568 = vld [vmem:[%s4] sm:$0xff]
    %v569 = vld [vmem:[%s4 + $0x8] sm:$0xff]
    %v570 = vld [vmem:[%s4 + $0x10] sm:$0xff]
    %v571 = vld [vmem:[%s4 + $0x18] sm:$0xff]
    %v572 = vld [vmem:[%s4 + $0x20] sm:$0xff]
    %v573 = vld [vmem:[%s4 + $0x28] sm:$0xff]
    %v574 = vld [vmem:[%s4 + $0x30] sm:$0xff]
    %v575 = vld [vmem:[%s4 + $0x38] sm:$0xff]
    %v576 = vld [vmem:[%s5] sm:$0x1]
    %v578 = vperm.slane %v576, 0
    %vm580 = vcmask 523264
    %v582 = vsel %vm580, %v504, 0
    %v585 = vsel %vm580, %v505, 0
    %v588 = vsel %vm580, %v506, 0
    %v591 = vsel %vm580, %v507, 0
    %v594 = vsel %vm580, %v508, 0
    %v597 = vsel %vm580, %v509, 0
    %v600 = vsel %vm580, %v510, 0
    %v603 = vsel %vm580, %v511, 0
    %v606 = vsel %vm580, %v512, 0
    %v609 = vsel %vm580, %v513, 0
    %v612 = vsel %vm580, %v514, 0
    %v615 = vsel %vm580, %v515, 0
    %v618 = vsel %vm580, %v516, 0
    %v621 = vsel %vm580, %v517, 0
    %v624 = vsel %vm580, %v518, 0
    %v627 = vsel %vm580, %v519, 0
    %v630 = vsel %vm580, %v520, 0
    %v633 = vsel %vm580, %v521, 0
    %v636 = vsel %vm580, %v522, 0
    %v639 = vsel %vm580, %v523, 0
    %v642 = vsel %vm580, %v524, 0
    %v645 = vsel %vm580, %v525, 0
    %v648 = vsel %vm580, %v526, 0
    %v651 = vsel %vm580, %v527, 0
    %v654 = vsel %vm580, %v528, 0
    %v657 = vsel %vm580, %v529, 0
    %v660 = vsel %vm580, %v530, 0
    %v663 = vsel %vm580, %v531, 0
    %v666 = vsel %vm580, %v532, 0
    %v669 = vsel %vm580, %v533, 0
    %v672 = vsel %vm580, %v534, 0
    %v675 = vsel %vm580, %v535, 0
    %v678 = vsel %vm580, %v536, 0
    %v681 = vsel %vm580, %v537, 0
    %v684 = vsel %vm580, %v538, 0
    %v687 = vsel %vm580, %v539, 0
    %v690 = vsel %vm580, %v540, 0
    %v693 = vsel %vm580, %v541, 0
    %v696 = vsel %vm580, %v542, 0
    %v699 = vsel %vm580, %v543, 0
    %v702 = vsel %vm580, %v544, 0
    %v705 = vsel %vm580, %v545, 0
    %v708 = vsel %vm580, %v546, 0
    %v711 = vsel %vm580, %v547, 0
    %v714 = vsel %vm580, %v548, 0
    %v717 = vsel %vm580, %v549, 0
    %v720 = vsel %vm580, %v550, 0
    %v723 = vsel %vm580, %v551, 0
    %v726 = vsel %vm580, %v552, 0
    %v729 = vsel %vm580, %v553, 0
    %v732 = vsel %vm580, %v554, 0
    %v735 = vsel %vm580, %v555, 0
    %v738 = vsel %vm580, %v556, 0
    %v741 = vsel %vm580, %v557, 0
    %v744 = vsel %vm580, %v558, 0
    %v747 = vsel %vm580, %v559, 0
    %v750 = vsel %vm580, %v560, 0
    %v753 = vsel %vm580, %v561, 0
    %v756 = vsel %vm580, %v562, 0
    %v759 = vsel %vm580, %v563, 0
    %v762 = vsel %vm580, %v564, 0
    %v765 = vsel %vm580, %v565, 0
    %v768 = vsel %vm580, %v566, 0
    %v771 = vsel %vm580, %v567, 0
    %773 = vmatpush.msra.mxu0 0.0
    %774 = vmatpush.msra.mxu0 0.0
    %775 = vmatpush.msra.mxu0 0.0
    %776 = vmatpush.msra.mxu0 0.0
    %777 = vmatpush.msra.mxu0 0.0
    %778 = vmatpush.msra.mxu0 0.0
    %779 = vmatpush.msra.mxu0 0.0
    %780 = vmatpush.msra.mxu0 0.0
    %781 = vmatpush.msra.mxu0 %v575
    %782 = vmatpush.msra.mxu0 %v574
    %783 = vmatpush.msra.mxu0 %v573
    %784 = vmatpush.msra.mxu0 %v572
    %785 = vmatpush.msra.mxu0 %v571
    %786 = vmatpush.msra.mxu0 %v570
    %787 = vmatpush.msra.mxu0 %v569
    %788 = vmatpush.msra.mxu0 %v568
    %789 = vmatmul.f32.gmra.mxu0 %v582
    %v790 = vpop.f32.mrf.mxu0
    %v791 = vadd.f32 %v578, %v790
    %792 = vmatmul.f32.gmra.mxu0 %v585
    %v793 = vpop.f32.mrf.mxu0
    %v794 = vadd.f32 %v578, %v793
    %795 = vmatmul.f32.gmra.mxu0 %v588
    %v796 = vpop.f32.mrf.mxu0
    %v797 = vadd.f32 %v578, %v796
    %798 = vmatmul.f32.gmra.mxu0 %v591
    %v799 = vpop.f32.mrf.mxu0
    %v800 = vadd.f32 %v578, %v799
    %801 = vmatmul.f32.gmra.mxu0 %v594
    %v802 = vpop.f32.mrf.mxu0
    %v803 = vadd.f32 %v578, %v802
    %804 = vmatmul.f32.gmra.mxu0 %v597
    %v805 = vpop.f32.mrf.mxu0
    %v806 = vadd.f32 %v578, %v805
    %807 = vmatmul.f32.gmra.mxu0 %v600
    %v808 = vpop.f32.mrf.mxu0
    %v809 = vadd.f32 %v578, %v808
    %810 = vmatmul.f32.gmra.mxu0 %v603
    %v811 = vpop.f32.mrf.mxu0
    %v812 = vadd.f32 %v578, %v811
    %813 = vmatmul.f32.gmra.mxu0 %v606
    %v814 = vpop.f32.mrf.mxu0
    %v815 = vadd.f32 %v578, %v814
    %816 = vmatmul.f32.gmra.mxu0 %v609
    %v817 = vpop.f32.mrf.mxu0
    %v818 = vadd.f32 %v578, %v817
    %819 = vmatmul.f32.gmra.mxu0 %v612
    %v820 = vpop.f32.mrf.mxu0
    %v821 = vadd.f32 %v578, %v820
    %822 = vmatmul.f32.gmra.mxu0 %v615
    %v823 = vpop.f32.mrf.mxu0
    %v824 = vadd.f32 %v578, %v823
    %825 = vmatmul.f32.gmra.mxu0 %v618
    %v826 = vpop.f32.mrf.mxu0
    %v827 = vadd.f32 %v578, %v826
    %828 = vmatmul.f32.gmra.mxu0 %v621
    %v829 = vpop.f32.mrf.mxu0
    %v830 = vadd.f32 %v578, %v829
    %831 = vmatmul.f32.gmra.mxu0 %v624
    %v832 = vpop.f32.mrf.mxu0
    %v833 = vadd.f32 %v578, %v832
    %834 = vmatmul.f32.gmra.mxu0 %v627
    %v835 = vpop.f32.mrf.mxu0
    %v836 = vadd.f32 %v578, %v835
    %837 = vmatmul.f32.gmra.mxu0 %v630
    %v838 = vpop.f32.mrf.mxu0
    %v839 = vadd.f32 %v578, %v838
    %840 = vmatmul.f32.gmra.mxu0 %v633
    %v841 = vpop.f32.mrf.mxu0
    %v842 = vadd.f32 %v578, %v841
    %843 = vmatmul.f32.gmra.mxu0 %v636
    %v844 = vpop.f32.mrf.mxu0
    %v845 = vadd.f32 %v578, %v844
    %846 = vmatmul.f32.gmra.mxu0 %v639
    %v847 = vpop.f32.mrf.mxu0
    %v848 = vadd.f32 %v578, %v847
    %849 = vmatmul.f32.gmra.mxu0 %v642
    %v850 = vpop.f32.mrf.mxu0
    %v851 = vadd.f32 %v578, %v850
    %852 = vmatmul.f32.gmra.mxu0 %v645
    %v853 = vpop.f32.mrf.mxu0
    %v854 = vadd.f32 %v578, %v853
    %855 = vmatmul.f32.gmra.mxu0 %v648
    %v856 = vpop.f32.mrf.mxu0
    %v857 = vadd.f32 %v578, %v856
    %858 = vmatmul.f32.gmra.mxu0 %v651
    %v859 = vpop.f32.mrf.mxu0
    %v860 = vadd.f32 %v578, %v859
    %861 = vmatmul.f32.gmra.mxu0 %v654
    %v862 = vpop.f32.mrf.mxu0
    %v863 = vadd.f32 %v578, %v862
    %864 = vmatmul.f32.gmra.mxu0 %v657
    %v865 = vpop.f32.mrf.mxu0
    %v866 = vadd.f32 %v578, %v865
    %867 = vmatmul.f32.gmra.mxu0 %v660
    %v868 = vpop.f32.mrf.mxu0
    %v869 = vadd.f32 %v578, %v868
    %870 = vmatmul.f32.gmra.mxu0 %v663
    %v871 = vpop.f32.mrf.mxu0
    %v872 = vadd.f32 %v578, %v871
    %873 = vmatmul.f32.gmra.mxu0 %v666
    %v874 = vpop.f32.mrf.mxu0
    %v875 = vadd.f32 %v578, %v874
    %876 = vmatmul.f32.gmra.mxu0 %v669
    %v877 = vpop.f32.mrf.mxu0
    %v878 = vadd.f32 %v578, %v877
    %879 = vmatmul.f32.gmra.mxu0 %v672
    %v880 = vpop.f32.mrf.mxu0
    %v881 = vadd.f32 %v578, %v880
    %882 = vmatmul.f32.gmra.mxu0 %v675
    %v883 = vpop.f32.mrf.mxu0
    %v884 = vadd.f32 %v578, %v883
    %885 = vmatmul.f32.gmra.mxu0 %v678
    %v886 = vpop.f32.mrf.mxu0
    %v887 = vadd.f32 %v578, %v886
    %888 = vmatmul.f32.gmra.mxu0 %v681
    %v889 = vpop.f32.mrf.mxu0
    %v890 = vadd.f32 %v578, %v889
    %891 = vmatmul.f32.gmra.mxu0 %v684
    %v892 = vpop.f32.mrf.mxu0
    %v893 = vadd.f32 %v578, %v892
    %894 = vmatmul.f32.gmra.mxu0 %v687
    %v895 = vpop.f32.mrf.mxu0
    %v896 = vadd.f32 %v578, %v895
    %897 = vmatmul.f32.gmra.mxu0 %v690
    %v898 = vpop.f32.mrf.mxu0
    %v899 = vadd.f32 %v578, %v898
    %900 = vmatmul.f32.gmra.mxu0 %v693
    %v901 = vpop.f32.mrf.mxu0
    %v902 = vadd.f32 %v578, %v901
    %903 = vmatmul.f32.gmra.mxu0 %v696
    %v904 = vpop.f32.mrf.mxu0
    %v905 = vadd.f32 %v578, %v904
    %906 = vmatmul.f32.gmra.mxu0 %v699
    %v907 = vpop.f32.mrf.mxu0
    %v908 = vadd.f32 %v578, %v907
    %909 = vmatmul.f32.gmra.mxu0 %v702
    %v910 = vpop.f32.mrf.mxu0
    %v911 = vadd.f32 %v578, %v910
    %912 = vmatmul.f32.gmra.mxu0 %v705
    %v913 = vpop.f32.mrf.mxu0
    %v914 = vadd.f32 %v578, %v913
    %915 = vmatmul.f32.gmra.mxu0 %v708
    %v916 = vpop.f32.mrf.mxu0
    %v917 = vadd.f32 %v578, %v916
    %918 = vmatmul.f32.gmra.mxu0 %v711
    %v919 = vpop.f32.mrf.mxu0
    %v920 = vadd.f32 %v578, %v919
    %921 = vmatmul.f32.gmra.mxu0 %v714
    %v922 = vpop.f32.mrf.mxu0
    %v923 = vadd.f32 %v578, %v922
    %924 = vmatmul.f32.gmra.mxu0 %v717
    %v925 = vpop.f32.mrf.mxu0
    %v926 = vadd.f32 %v578, %v925
    %927 = vmatmul.f32.gmra.mxu0 %v720
    %v928 = vpop.f32.mrf.mxu0
    %v929 = vadd.f32 %v578, %v928
    %930 = vmatmul.f32.gmra.mxu0 %v723
    %v931 = vpop.f32.mrf.mxu0
    %v932 = vadd.f32 %v578, %v931
    %933 = vmatmul.f32.gmra.mxu0 %v726
    %v934 = vpop.f32.mrf.mxu0
    %v935 = vadd.f32 %v578, %v934
    %936 = vmatmul.f32.gmra.mxu0 %v729
    %v937 = vpop.f32.mrf.mxu0
    %v938 = vadd.f32 %v578, %v937
    %939 = vmatmul.f32.gmra.mxu0 %v732
    %v940 = vpop.f32.mrf.mxu0
    %v941 = vadd.f32 %v578, %v940
    %942 = vmatmul.f32.gmra.mxu0 %v735
    %v943 = vpop.f32.mrf.mxu0
    %v944 = vadd.f32 %v578, %v943
    %945 = vmatmul.f32.gmra.mxu0 %v738
    %v946 = vpop.f32.mrf.mxu0
    %v947 = vadd.f32 %v578, %v946
    %948 = vmatmul.f32.gmra.mxu0 %v741
    %v949 = vpop.f32.mrf.mxu0
    %v950 = vadd.f32 %v578, %v949
    %951 = vmatmul.f32.gmra.mxu0 %v744
    %v952 = vpop.f32.mrf.mxu0
    %v953 = vadd.f32 %v578, %v952
    %954 = vmatmul.f32.gmra.mxu0 %v747
    %v955 = vpop.f32.mrf.mxu0
    %v956 = vadd.f32 %v578, %v955
    %957 = vmatmul.f32.gmra.mxu0 %v750
    %v958 = vpop.f32.mrf.mxu0
    %v959 = vadd.f32 %v578, %v958
    %960 = vmatmul.f32.gmra.mxu0 %v753
    %v961 = vpop.f32.mrf.mxu0
    %v962 = vadd.f32 %v578, %v961
    %963 = vmatmul.f32.gmra.mxu0 %v756
    %v964 = vpop.f32.mrf.mxu0
    %v965 = vadd.f32 %v578, %v964
    %966 = vmatmul.f32.gmra.mxu0 %v759
    %v967 = vpop.f32.mrf.mxu0
    %v968 = vadd.f32 %v578, %v967
    %969 = vmatmul.f32.gmra.mxu0 %v762
    %v970 = vpop.f32.mrf.mxu0
    %v971 = vadd.f32 %v578, %v970
    %972 = vmatmul.f32.gmra.mxu0 %v765
    %v973 = vpop.f32.mrf.mxu0
    %v974 = vadd.f32 %v578, %v973
    %975 = vmatmul.f32.gmra.mxu0 %v768
    %v976 = vpop.f32.mrf.mxu0
    %v977 = vadd.f32 %v578, %v976
    %978 = vmatmul.f32.gmra.mxu0 %v771
    %v979 = vpop.f32.mrf.mxu0
    %v980 = vadd.f32 %v578, %v979
    %981 = vdwg.mxu0
    %v982 = vmax.f32 %v791, 0.0
    %v983 = vmax.f32 %v794, 0.0
    %v984 = vmax.f32 %v797, 0.0
    %v985 = vmax.f32 %v800, 0.0
    %v986 = vmax.f32 %v803, 0.0
    %v987 = vmax.f32 %v806, 0.0
    %v988 = vmax.f32 %v809, 0.0
    %v989 = vmax.f32 %v812, 0.0
    %v990 = vmax.f32 %v815, 0.0
    %v991 = vmax.f32 %v818, 0.0
    %v992 = vmax.f32 %v821, 0.0
    %v993 = vmax.f32 %v824, 0.0
    %v994 = vmax.f32 %v827, 0.0
    %v995 = vmax.f32 %v830, 0.0
    %v996 = vmax.f32 %v833, 0.0
    %v997 = vmax.f32 %v836, 0.0
    %v998 = vmax.f32 %v839, 0.0
    %v999 = vmax.f32 %v842, 0.0
    %v1000 = vmax.f32 %v845, 0.0
    %v1001 = vmax.f32 %v848, 0.0
    %v1002 = vmax.f32 %v851, 0.0
    %v1003 = vmax.f32 %v854, 0.0
    %v1004 = vmax.f32 %v857, 0.0
    %v1005 = vmax.f32 %v860, 0.0
    %v1006 = vmax.f32 %v863, 0.0
    %v1007 = vmax.f32 %v866, 0.0
    %v1008 = vmax.f32 %v869, 0.0
    %v1009 = vmax.f32 %v872, 0.0
    %v1010 = vmax.f32 %v875, 0.0
    %v1011 = vmax.f32 %v878, 0.0
    %v1012 = vmax.f32 %v881, 0.0
    %v1013 = vmax.f32 %v884, 0.0
    %v1014 = vmax.f32 %v887, 0.0
    %v1015 = vmax.f32 %v890, 0.0
    %v1016 = vmax.f32 %v893, 0.0
    %v1017 = vmax.f32 %v896, 0.0
    %v1018 = vmax.f32 %v899, 0.0
    %v1019 = vmax.f32 %v902, 0.0
    %v1020 = vmax.f32 %v905, 0.0
    %v1021 = vmax.f32 %v908, 0.0
    %v1022 = vmax.f32 %v911, 0.0
    %v1023 = vmax.f32 %v914, 0.0
    %v1024 = vmax.f32 %v917, 0.0
    %v1025 = vmax.f32 %v920, 0.0
    %v1026 = vmax.f32 %v923, 0.0
    %v1027 = vmax.f32 %v926, 0.0
    %v1028 = vmax.f32 %v929, 0.0
    %v1029 = vmax.f32 %v932, 0.0
    %v1030 = vmax.f32 %v935, 0.0
    %v1031 = vmax.f32 %v938, 0.0
    %v1032 = vmax.f32 %v941, 0.0
    %v1033 = vmax.f32 %v944, 0.0
    %v1034 = vmax.f32 %v947, 0.0
    %v1035 = vmax.f32 %v950, 0.0
    %v1036 = vmax.f32 %v953, 0.0
    %v1037 = vmax.f32 %v956, 0.0
    %v1038 = vmax.f32 %v959, 0.0
    %v1039 = vmax.f32 %v962, 0.0
    %v1040 = vmax.f32 %v965, 0.0
    %v1041 = vmax.f32 %v968, 0.0
    %v1042 = vmax.f32 %v971, 0.0
    %v1043 = vmax.f32 %v974, 0.0
    %v1044 = vmax.f32 %v977, 0.0
    %v1045 = vmax.f32 %v980, 0.0
    %v1046 = vld [vmem:[%s0] sm:$0xff]
    %v1047 = vld [vmem:[%s0 + $0x8] sm:$0xff]
    %v1048 = vld [vmem:[%s0 + $0x10] sm:$0xff]
    %v1049 = vld [vmem:[%s0 + $0x18] sm:$0xff]
    %v1050 = vld [vmem:[%s0 + $0x20] sm:$0xff]
    %v1051 = vld [vmem:[%s0 + $0x28] sm:$0xff]
    %v1052 = vld [vmem:[%s0 + $0x30] sm:$0xff]
    %v1053 = vld [vmem:[%s0 + $0x38] sm:$0xff]
    %v1054 = vld [vmem:[%s0 + $0x40] sm:$0xff]
    %v1055 = vld [vmem:[%s0 + $0x48] sm:$0xff]
    %v1056 = vld [vmem:[%s0 + $0x50] sm:$0xff]
    %v1057 = vld [vmem:[%s0 + $0x58] sm:$0xff]
    %v1058 = vld [vmem:[%s0 + $0x60] sm:$0xff]
    %v1059 = vld [vmem:[%s0 + $0x68] sm:$0xff]
    %v1060 = vld [vmem:[%s0 + $0x70] sm:$0xff]
    %v1061 = vld [vmem:[%s0 + $0x78] sm:$0xff]
    %v1062 = vld [vmem:[%s0 + $0x80] sm:$0xff]
    %v1063 = vld [vmem:[%s0 + $0x88] sm:$0xff]
    %v1064 = vld [vmem:[%s0 + $0x90] sm:$0xff]
    %v1065 = vld [vmem:[%s0 + $0x98] sm:$0xff]
    %v1066 = vld [vmem:[%s0 + $0xa0] sm:$0xff]
    %v1067 = vld [vmem:[%s0 + $0xa8] sm:$0xff]
    %v1068 = vld [vmem:[%s0 + $0xb0] sm:$0xff]
    %v1069 = vld [vmem:[%s0 + $0xb8] sm:$0xff]
    %v1070 = vld [vmem:[%s0 + $0xc0] sm:$0xff]
    %v1071 = vld [vmem:[%s0 + $0xc8] sm:$0xff]
    %v1072 = vld [vmem:[%s0 + $0xd0] sm:$0xff]
    %v1073 = vld [vmem:[%s0 + $0xd8] sm:$0xff]
    %v1074 = vld [vmem:[%s0 + $0xe0] sm:$0xff]
    %v1075 = vld [vmem:[%s0 + $0xe8] sm:$0xff]
    %v1076 = vld [vmem:[%s0 + $0xf0] sm:$0xff]
    %v1077 = vld [vmem:[%s0 + $0xf8] sm:$0xff]
    %v1078 = vld [vmem:[%s0 + $0x100] sm:$0xff]
    %v1079 = vld [vmem:[%s0 + $0x108] sm:$0xff]
    %v1080 = vld [vmem:[%s0 + $0x110] sm:$0xff]
    %v1081 = vld [vmem:[%s0 + $0x118] sm:$0xff]
    %v1082 = vld [vmem:[%s0 + $0x120] sm:$0xff]
    %v1083 = vld [vmem:[%s0 + $0x128] sm:$0xff]
    %v1084 = vld [vmem:[%s0 + $0x130] sm:$0xff]
    %v1085 = vld [vmem:[%s0 + $0x138] sm:$0xff]
    %v1086 = vld [vmem:[%s0 + $0x140] sm:$0xff]
    %v1087 = vld [vmem:[%s0 + $0x148] sm:$0xff]
    %v1088 = vld [vmem:[%s0 + $0x150] sm:$0xff]
    %v1089 = vld [vmem:[%s0 + $0x158] sm:$0xff]
    %v1090 = vld [vmem:[%s0 + $0x160] sm:$0xff]
    %v1091 = vld [vmem:[%s0 + $0x168] sm:$0xff]
    %v1092 = vld [vmem:[%s0 + $0x170] sm:$0xff]
    %v1093 = vld [vmem:[%s0 + $0x178] sm:$0xff]
    %v1094 = vld [vmem:[%s0 + $0x180] sm:$0xff]
    %v1095 = vld [vmem:[%s0 + $0x188] sm:$0xff]
    %v1096 = vld [vmem:[%s0 + $0x190] sm:$0xff]
    %v1097 = vld [vmem:[%s0 + $0x198] sm:$0xff]
    %v1098 = vld [vmem:[%s0 + $0x1a0] sm:$0xff]
    %v1099 = vld [vmem:[%s0 + $0x1a8] sm:$0xff]
    %v1100 = vld [vmem:[%s0 + $0x1b0] sm:$0xff]
    %v1101 = vld [vmem:[%s0 + $0x1b8] sm:$0xff]
    %v1102 = vld [vmem:[%s0 + $0x1c0] sm:$0xff]
    %v1103 = vld [vmem:[%s0 + $0x1c8] sm:$0xff]
    %v1104 = vld [vmem:[%s0 + $0x1d0] sm:$0xff]
    %v1105 = vld [vmem:[%s0 + $0x1d8] sm:$0xff]
    %v1106 = vld [vmem:[%s0 + $0x1e0] sm:$0xff]
    %v1107 = vld [vmem:[%s0 + $0x1e8] sm:$0xff]
    %v1108 = vld [vmem:[%s0 + $0x1f0] sm:$0xff]
    %v1109 = vld [vmem:[%s0 + $0x1f8] sm:$0xff]
    %vm1110 = vcmp.eq.s32.totalorder %v1046, 0
    %vm1111 = vcmp.eq.s32.totalorder %v1047, 0
    %vm1112 = vcmp.eq.s32.totalorder %v1048, 0
    %vm1113 = vcmp.eq.s32.totalorder %v1049, 0
    %vm1114 = vcmp.eq.s32.totalorder %v1050, 0
    %vm1115 = vcmp.eq.s32.totalorder %v1051, 0
    %vm1116 = vcmp.eq.s32.totalorder %v1052, 0
    %vm1117 = vcmp.eq.s32.totalorder %v1053, 0
    %vm1118 = vcmp.eq.s32.totalorder %v1054, 0
    %vm1119 = vcmp.eq.s32.totalorder %v1055, 0
    %vm1120 = vcmp.eq.s32.totalorder %v1056, 0
    %vm1121 = vcmp.eq.s32.totalorder %v1057, 0
    %vm1122 = vcmp.eq.s32.totalorder %v1058, 0
    %vm1123 = vcmp.eq.s32.totalorder %v1059, 0
    %vm1124 = vcmp.eq.s32.totalorder %v1060, 0
    %vm1125 = vcmp.eq.s32.totalorder %v1061, 0
    %vm1126 = vcmp.eq.s32.totalorder %v1062, 0
    %vm1127 = vcmp.eq.s32.totalorder %v1063, 0
    %vm1128 = vcmp.eq.s32.totalorder %v1064, 0
    %vm1129 = vcmp.eq.s32.totalorder %v1065, 0
    %vm1130 = vcmp.eq.s32.totalorder %v1066, 0
    %vm1131 = vcmp.eq.s32.totalorder %v1067, 0
    %vm1132 = vcmp.eq.s32.totalorder %v1068, 0
    %vm1133 = vcmp.eq.s32.totalorder %v1069, 0
    %vm1134 = vcmp.eq.s32.totalorder %v1070, 0
    %vm1135 = vcmp.eq.s32.totalorder %v1071, 0
    %vm1136 = vcmp.eq.s32.totalorder %v1072, 0
    %vm1137 = vcmp.eq.s32.totalorder %v1073, 0
    %vm1138 = vcmp.eq.s32.totalorder %v1074, 0
    %vm1139 = vcmp.eq.s32.totalorder %v1075, 0
    %vm1140 = vcmp.eq.s32.totalorder %v1076, 0
    %vm1141 = vcmp.eq.s32.totalorder %v1077, 0
    %vm1142 = vcmp.eq.s32.totalorder %v1078, 0
    %vm1143 = vcmp.eq.s32.totalorder %v1079, 0
    %vm1144 = vcmp.eq.s32.totalorder %v1080, 0
    %vm1145 = vcmp.eq.s32.totalorder %v1081, 0
    %vm1146 = vcmp.eq.s32.totalorder %v1082, 0
    %vm1147 = vcmp.eq.s32.totalorder %v1083, 0
    %vm1148 = vcmp.eq.s32.totalorder %v1084, 0
    %vm1149 = vcmp.eq.s32.totalorder %v1085, 0
    %vm1150 = vcmp.eq.s32.totalorder %v1086, 0
    %vm1151 = vcmp.eq.s32.totalorder %v1087, 0
    %vm1152 = vcmp.eq.s32.totalorder %v1088, 0
    %vm1153 = vcmp.eq.s32.totalorder %v1089, 0
    %vm1154 = vcmp.eq.s32.totalorder %v1090, 0
    %vm1155 = vcmp.eq.s32.totalorder %v1091, 0
    %vm1156 = vcmp.eq.s32.totalorder %v1092, 0
    %vm1157 = vcmp.eq.s32.totalorder %v1093, 0
    %vm1158 = vcmp.eq.s32.totalorder %v1094, 0
    %vm1159 = vcmp.eq.s32.totalorder %v1095, 0
    %vm1160 = vcmp.eq.s32.totalorder %v1096, 0
    %vm1161 = vcmp.eq.s32.totalorder %v1097, 0
    %vm1162 = vcmp.eq.s32.totalorder %v1098, 0
    %vm1163 = vcmp.eq.s32.totalorder %v1099, 0
    %vm1164 = vcmp.eq.s32.totalorder %v1100, 0
    %vm1165 = vcmp.eq.s32.totalorder %v1101, 0
    %vm1166 = vcmp.eq.s32.totalorder %v1102, 0
    %vm1167 = vcmp.eq.s32.totalorder %v1103, 0
    %vm1168 = vcmp.eq.s32.totalorder %v1104, 0
    %vm1169 = vcmp.eq.s32.totalorder %v1105, 0
    %vm1170 = vcmp.eq.s32.totalorder %v1106, 0
    %vm1171 = vcmp.eq.s32.totalorder %v1107, 0
    %vm1172 = vcmp.eq.s32.totalorder %v1108, 0
    %vm1173 = vcmp.eq.s32.totalorder %v1109, 0
    %v1174 = vsel %vm1110, 1, 0
    %v1175 = vsel %vm1111, 1, 0
    %v1176 = vsel %vm1112, 1, 0
    %v1177 = vsel %vm1113, 1, 0
    %v1178 = vsel %vm1114, 1, 0
    %v1179 = vsel %vm1115, 1, 0
    %v1180 = vsel %vm1116, 1, 0
    %v1181 = vsel %vm1117, 1, 0
    %v1182 = vsel %vm1118, 1, 0
    %v1183 = vsel %vm1119, 1, 0
    %v1184 = vsel %vm1120, 1, 0
    %v1185 = vsel %vm1121, 1, 0
    %v1186 = vsel %vm1122, 1, 0
    %v1187 = vsel %vm1123, 1, 0
    %v1188 = vsel %vm1124, 1, 0
    %v1189 = vsel %vm1125, 1, 0
    %v1190 = vsel %vm1126, 1, 0
    %v1191 = vsel %vm1127, 1, 0
    %v1192 = vsel %vm1128, 1, 0
    %v1193 = vsel %vm1129, 1, 0
    %v1194 = vsel %vm1130, 1, 0
    %v1195 = vsel %vm1131, 1, 0
    %v1196 = vsel %vm1132, 1, 0
    %v1197 = vsel %vm1133, 1, 0
    %v1198 = vsel %vm1134, 1, 0
    %v1199 = vsel %vm1135, 1, 0
    %v1200 = vsel %vm1136, 1, 0
    %v1201 = vsel %vm1137, 1, 0
    %v1202 = vsel %vm1138, 1, 0
    %v1203 = vsel %vm1139, 1, 0
    %v1204 = vsel %vm1140, 1, 0
    %v1205 = vsel %vm1141, 1, 0
    %v1206 = vsel %vm1142, 1, 0
    %v1207 = vsel %vm1143, 1, 0
    %v1208 = vsel %vm1144, 1, 0
    %v1209 = vsel %vm1145, 1, 0
    %v1210 = vsel %vm1146, 1, 0
    %v1211 = vsel %vm1147, 1, 0
    %v1212 = vsel %vm1148, 1, 0
    %v1213 = vsel %vm1149, 1, 0
    %v1214 = vsel %vm1150, 1, 0
    %v1215 = vsel %vm1151, 1, 0
    %v1216 = vsel %vm1152, 1, 0
    %v1217 = vsel %vm1153, 1, 0
    %v1218 = vsel %vm1154, 1, 0
    %v1219 = vsel %vm1155, 1, 0
    %v1220 = vsel %vm1156, 1, 0
    %v1221 = vsel %vm1157, 1, 0
    %v1222 = vsel %vm1158, 1, 0
    %v1223 = vsel %vm1159, 1, 0
    %v1224 = vsel %vm1160, 1, 0
    %v1225 = vsel %vm1161, 1, 0
    %v1226 = vsel %vm1162, 1, 0
    %v1227 = vsel %vm1163, 1, 0
    %v1228 = vsel %vm1164, 1, 0
    %v1229 = vsel %vm1165, 1, 0
    %v1230 = vsel %vm1166, 1, 0
    %v1231 = vsel %vm1167, 1, 0
    %v1232 = vsel %vm1168, 1, 0
    %v1233 = vsel %vm1169, 1, 0
    %v1234 = vsel %vm1170, 1, 0
    %v1235 = vsel %vm1171, 1, 0
    %v1236 = vsel %vm1172, 1, 0
    %v1237 = vsel %vm1173, 1, 0
    %1238 = vset.pattern.permute.xlu0 0
    %1239 = vperm.xlu0 %1238, %v1174
    %v1240 = vpop.permute.xlu0 %1239
    %1241 = vset.pattern.permute.xlu0 0
    %1242 = vperm.xlu0 %1241, %v1175
    %v1243 = vpop.permute.xlu0 %1242
    %1244 = vset.pattern.permute.xlu0 0
    %1245 = vperm.xlu0 %1244, %v1176
    %v1246 = vpop.permute.xlu0 %1245
    %1247 = vset.pattern.permute.xlu0 0
    %1248 = vperm.xlu0 %1247, %v1177
    %v1249 = vpop.permute.xlu0 %1248
    %1250 = vset.pattern.permute.xlu0 0
    %1251 = vperm.xlu0 %1250, %v1178
    %v1252 = vpop.permute.xlu0 %1251
    %1253 = vset.pattern.permute.xlu0 0
    %1254 = vperm.xlu0 %1253, %v1179
    %v1255 = vpop.permute.xlu0 %1254
    %1256 = vset.pattern.permute.xlu0 0
    %1257 = vperm.xlu0 %1256, %v1180
    %v1258 = vpop.permute.xlu0 %1257
    %1259 = vset.pattern.permute.xlu0 0
    %1260 = vperm.xlu0 %1259, %v1181
    %v1261 = vpop.permute.xlu0 %1260
    %1262 = vset.pattern.permute.xlu0 0
    %1263 = vperm.xlu0 %1262, %v1182
    %v1264 = vpop.permute.xlu0 %1263
    %1265 = vset.pattern.permute.xlu0 0
    %1266 = vperm.xlu0 %1265, %v1183
    %v1267 = vpop.permute.xlu0 %1266
    %1268 = vset.pattern.permute.xlu0 0
    %1269 = vperm.xlu0 %1268, %v1184
    %v1270 = vpop.permute.xlu0 %1269
    %1271 = vset.pattern.permute.xlu0 0
    %1272 = vperm.xlu0 %1271, %v1185
    %v1273 = vpop.permute.xlu0 %1272
    %1274 = vset.pattern.permute.xlu0 0
    %1275 = vperm.xlu0 %1274, %v1186
    %v1276 = vpop.permute.xlu0 %1275
    %1277 = vset.pattern.permute.xlu0 0
    %1278 = vperm.xlu0 %1277, %v1187
    %v1279 = vpop.permute.xlu0 %1278
    %1280 = vset.pattern.permute.xlu0 0
    %1281 = vperm.xlu0 %1280, %v1188
    %v1282 = vpop.permute.xlu0 %1281
    %1283 = vset.pattern.permute.xlu0 0
    %1284 = vperm.xlu0 %1283, %v1189
    %v1285 = vpop.permute.xlu0 %1284
    %1286 = vset.pattern.permute.xlu0 0
    %1287 = vperm.xlu0 %1286, %v1190
    %v1288 = vpop.permute.xlu0 %1287
    %1289 = vset.pattern.permute.xlu0 0
    %1290 = vperm.xlu0 %1289, %v1191
    %v1291 = vpop.permute.xlu0 %1290
    %1292 = vset.pattern.permute.xlu0 0
    %1293 = vperm.xlu0 %1292, %v1192
    %v1294 = vpop.permute.xlu0 %1293
    %1295 = vset.pattern.permute.xlu0 0
    %1296 = vperm.xlu0 %1295, %v1193
    %v1297 = vpop.permute.xlu0 %1296
    %1298 = vset.pattern.permute.xlu0 0
    %1299 = vperm.xlu0 %1298, %v1194
    %v1300 = vpop.permute.xlu0 %1299
    %1301 = vset.pattern.permute.xlu0 0
    %1302 = vperm.xlu0 %1301, %v1195
    %v1303 = vpop.permute.xlu0 %1302
    %1304 = vset.pattern.permute.xlu0 0
    %1305 = vperm.xlu0 %1304, %v1196
    %v1306 = vpop.permute.xlu0 %1305
    %1307 = vset.pattern.permute.xlu0 0
    %1308 = vperm.xlu0 %1307, %v1197
    %v1309 = vpop.permute.xlu0 %1308
    %1310 = vset.pattern.permute.xlu0 0
    %1311 = vperm.xlu0 %1310, %v1198
    %v1312 = vpop.permute.xlu0 %1311
    %1313 = vset.pattern.permute.xlu0 0
    %1314 = vperm.xlu0 %1313, %v1199
    %v1315 = vpop.permute.xlu0 %1314
    %1316 = vset.pattern.permute.xlu0 0
    %1317 = vperm.xlu0 %1316, %v1200
    %v1318 = vpop.permute.xlu0 %1317
    %1319 = vset.pattern.permute.xlu0 0
    %1320 = vperm.xlu0 %1319, %v1201
    %v1321 = vpop.permute.xlu0 %1320
    %1322 = vset.pattern.permute.xlu0 0
    %1323 = vperm.xlu0 %1322, %v1202
    %v1324 = vpop.permute.xlu0 %1323
    %1325 = vset.pattern.permute.xlu0 0
    %1326 = vperm.xlu0 %1325, %v1203
    %v1327 = vpop.permute.xlu0 %1326
    %1328 = vset.pattern.permute.xlu0 0
    %1329 = vperm.xlu0 %1328, %v1204
    %v1330 = vpop.permute.xlu0 %1329
    %1331 = vset.pattern.permute.xlu0 0
    %1332 = vperm.xlu0 %1331, %v1205
    %v1333 = vpop.permute.xlu0 %1332
    %1334 = vset.pattern.permute.xlu0 0
    %1335 = vperm.xlu0 %1334, %v1206
    %v1336 = vpop.permute.xlu0 %1335
    %1337 = vset.pattern.permute.xlu0 0
    %1338 = vperm.xlu0 %1337, %v1207
    %v1339 = vpop.permute.xlu0 %1338
    %1340 = vset.pattern.permute.xlu0 0
    %1341 = vperm.xlu0 %1340, %v1208
    %v1342 = vpop.permute.xlu0 %1341
    %1343 = vset.pattern.permute.xlu0 0
    %1344 = vperm.xlu0 %1343, %v1209
    %v1345 = vpop.permute.xlu0 %1344
    %1346 = vset.pattern.permute.xlu0 0
    %1347 = vperm.xlu0 %1346, %v1210
    %v1348 = vpop.permute.xlu0 %1347
    %1349 = vset.pattern.permute.xlu0 0
    %1350 = vperm.xlu0 %1349, %v1211
    %v1351 = vpop.permute.xlu0 %1350
    %1352 = vset.pattern.permute.xlu0 0
    %1353 = vperm.xlu0 %1352, %v1212
    %v1354 = vpop.permute.xlu0 %1353
    %1355 = vset.pattern.permute.xlu0 0
    %1356 = vperm.xlu0 %1355, %v1213
    %v1357 = vpop.permute.xlu0 %1356
    %1358 = vset.pattern.permute.xlu0 0
    %1359 = vperm.xlu0 %1358, %v1214
    %v1360 = vpop.permute.xlu0 %1359
    %1361 = vset.pattern.permute.xlu0 0
    %1362 = vperm.xlu0 %1361, %v1215
    %v1363 = vpop.permute.xlu0 %1362
    %1364 = vset.pattern.permute.xlu0 0
    %1365 = vperm.xlu0 %1364, %v1216
    %v1366 = vpop.permute.xlu0 %1365
    %1367 = vset.pattern.permute.xlu0 0
    %1368 = vperm.xlu0 %1367, %v1217
    %v1369 = vpop.permute.xlu0 %1368
    %1370 = vset.pattern.permute.xlu0 0
    %1371 = vperm.xlu0 %1370, %v1218
    %v1372 = vpop.permute.xlu0 %1371
    %1373 = vset.pattern.permute.xlu0 0
    %1374 = vperm.xlu0 %1373, %v1219
    %v1375 = vpop.permute.xlu0 %1374
    %1376 = vset.pattern.permute.xlu0 0
    %1377 = vperm.xlu0 %1376, %v1220
    %v1378 = vpop.permute.xlu0 %1377
    %1379 = vset.pattern.permute.xlu0 0
    %1380 = vperm.xlu0 %1379, %v1221
    %v1381 = vpop.permute.xlu0 %1380
    %1382 = vset.pattern.permute.xlu0 0
    %1383 = vperm.xlu0 %1382, %v1222
    %v1384 = vpop.permute.xlu0 %1383
    %1385 = vset.pattern.permute.xlu0 0
    %1386 = vperm.xlu0 %1385, %v1223
    %v1387 = vpop.permute.xlu0 %1386
    %1388 = vset.pattern.permute.xlu0 0
    %1389 = vperm.xlu0 %1388, %v1224
    %v1390 = vpop.permute.xlu0 %1389
    %1391 = vset.pattern.permute.xlu0 0
    %1392 = vperm.xlu0 %1391, %v1225
    %v1393 = vpop.permute.xlu0 %1392
    %1394 = vset.pattern.permute.xlu0 0
    %1395 = vperm.xlu0 %1394, %v1226
    %v1396 = vpop.permute.xlu0 %1395
    %1397 = vset.pattern.permute.xlu0 0
    %1398 = vperm.xlu0 %1397, %v1227
    %v1399 = vpop.permute.xlu0 %1398
    %1400 = vset.pattern.permute.xlu0 0
    %1401 = vperm.xlu0 %1400, %v1228
    %v1402 = vpop.permute.xlu0 %1401
    %1403 = vset.pattern.permute.xlu0 0
    %1404 = vperm.xlu0 %1403, %v1229
    %v1405 = vpop.permute.xlu0 %1404
    %1406 = vset.pattern.permute.xlu0 0
    %1407 = vperm.xlu0 %1406, %v1230
    %v1408 = vpop.permute.xlu0 %1407
    %1409 = vset.pattern.permute.xlu0 0
    %1410 = vperm.xlu0 %1409, %v1231
    %v1411 = vpop.permute.xlu0 %1410
    %1412 = vset.pattern.permute.xlu0 0
    %1413 = vperm.xlu0 %1412, %v1232
    %v1414 = vpop.permute.xlu0 %1413
    %1415 = vset.pattern.permute.xlu0 0
    %1416 = vperm.xlu0 %1415, %v1233
    %v1417 = vpop.permute.xlu0 %1416
    %1418 = vset.pattern.permute.xlu0 0
    %1419 = vperm.xlu0 %1418, %v1234
    %v1420 = vpop.permute.xlu0 %1419
    %1421 = vset.pattern.permute.xlu0 0
    %1422 = vperm.xlu0 %1421, %v1235
    %v1423 = vpop.permute.xlu0 %1422
    %1424 = vset.pattern.permute.xlu0 0
    %1425 = vperm.xlu0 %1424, %v1236
    %v1426 = vpop.permute.xlu0 %1425
    %1427 = vset.pattern.permute.xlu0 0
    %1428 = vperm.xlu0 %1427, %v1237
    %v1429 = vpop.permute.xlu0 %1428
    %vm1430 = vcmp.eq.s32.totalorder %v1240, 1
    %vm1431 = vcmp.eq.s32.totalorder %v1243, 1
    %vm1432 = vcmp.eq.s32.totalorder %v1246, 1
    %vm1433 = vcmp.eq.s32.totalorder %v1249, 1
    %vm1434 = vcmp.eq.s32.totalorder %v1252, 1
    %vm1435 = vcmp.eq.s32.totalorder %v1255, 1
    %vm1436 = vcmp.eq.s32.totalorder %v1258, 1
    %vm1437 = vcmp.eq.s32.totalorder %v1261, 1
    %vm1438 = vcmp.eq.s32.totalorder %v1264, 1
    %vm1439 = vcmp.eq.s32.totalorder %v1267, 1
    %vm1440 = vcmp.eq.s32.totalorder %v1270, 1
    %vm1441 = vcmp.eq.s32.totalorder %v1273, 1
    %vm1442 = vcmp.eq.s32.totalorder %v1276, 1
    %vm1443 = vcmp.eq.s32.totalorder %v1279, 1
    %vm1444 = vcmp.eq.s32.totalorder %v1282, 1
    %vm1445 = vcmp.eq.s32.totalorder %v1285, 1
    %vm1446 = vcmp.eq.s32.totalorder %v1288, 1
    %vm1447 = vcmp.eq.s32.totalorder %v1291, 1
    %vm1448 = vcmp.eq.s32.totalorder %v1294, 1
    %vm1449 = vcmp.eq.s32.totalorder %v1297, 1
    %vm1450 = vcmp.eq.s32.totalorder %v1300, 1
    %vm1451 = vcmp.eq.s32.totalorder %v1303, 1
    %vm1452 = vcmp.eq.s32.totalorder %v1306, 1
    %vm1453 = vcmp.eq.s32.totalorder %v1309, 1
    %vm1454 = vcmp.eq.s32.totalorder %v1312, 1
    %vm1455 = vcmp.eq.s32.totalorder %v1315, 1
    %vm1456 = vcmp.eq.s32.totalorder %v1318, 1
    %vm1457 = vcmp.eq.s32.totalorder %v1321, 1
    %vm1458 = vcmp.eq.s32.totalorder %v1324, 1
    %vm1459 = vcmp.eq.s32.totalorder %v1327, 1
    %vm1460 = vcmp.eq.s32.totalorder %v1330, 1
    %vm1461 = vcmp.eq.s32.totalorder %v1333, 1
    %vm1462 = vcmp.eq.s32.totalorder %v1336, 1
    %vm1463 = vcmp.eq.s32.totalorder %v1339, 1
    %vm1464 = vcmp.eq.s32.totalorder %v1342, 1
    %vm1465 = vcmp.eq.s32.totalorder %v1345, 1
    %vm1466 = vcmp.eq.s32.totalorder %v1348, 1
    %vm1467 = vcmp.eq.s32.totalorder %v1351, 1
    %vm1468 = vcmp.eq.s32.totalorder %v1354, 1
    %vm1469 = vcmp.eq.s32.totalorder %v1357, 1
    %vm1470 = vcmp.eq.s32.totalorder %v1360, 1
    %vm1471 = vcmp.eq.s32.totalorder %v1363, 1
    %vm1472 = vcmp.eq.s32.totalorder %v1366, 1
    %vm1473 = vcmp.eq.s32.totalorder %v1369, 1
    %vm1474 = vcmp.eq.s32.totalorder %v1372, 1
    %vm1475 = vcmp.eq.s32.totalorder %v1375, 1
    %vm1476 = vcmp.eq.s32.totalorder %v1378, 1
    %vm1477 = vcmp.eq.s32.totalorder %v1381, 1
    %vm1478 = vcmp.eq.s32.totalorder %v1384, 1
    %vm1479 = vcmp.eq.s32.totalorder %v1387, 1
    %vm1480 = vcmp.eq.s32.totalorder %v1390, 1
    %vm1481 = vcmp.eq.s32.totalorder %v1393, 1
    %vm1482 = vcmp.eq.s32.totalorder %v1396, 1
    %vm1483 = vcmp.eq.s32.totalorder %v1399, 1
    %vm1484 = vcmp.eq.s32.totalorder %v1402, 1
    %vm1485 = vcmp.eq.s32.totalorder %v1405, 1
    %vm1486 = vcmp.eq.s32.totalorder %v1408, 1
    %vm1487 = vcmp.eq.s32.totalorder %v1411, 1
    %vm1488 = vcmp.eq.s32.totalorder %v1414, 1
    %vm1489 = vcmp.eq.s32.totalorder %v1417, 1
    %vm1490 = vcmp.eq.s32.totalorder %v1420, 1
    %vm1491 = vcmp.eq.s32.totalorder %v1423, 1
    %vm1492 = vcmp.eq.s32.totalorder %v1426, 1
    %vm1493 = vcmp.eq.s32.totalorder %v1429, 1
    %v1494 = vsel %vm1430, %v982, 0.0
    %v1495 = vsel %vm1431, %v983, 0.0
    %v1496 = vsel %vm1432, %v984, 0.0
    %v1497 = vsel %vm1433, %v985, 0.0
    %v1498 = vsel %vm1434, %v986, 0.0
    %v1499 = vsel %vm1435, %v987, 0.0
    %v1500 = vsel %vm1436, %v988, 0.0
    %v1501 = vsel %vm1437, %v989, 0.0
    %v1502 = vsel %vm1438, %v990, 0.0
    %v1503 = vsel %vm1439, %v991, 0.0
    %v1504 = vsel %vm1440, %v992, 0.0
    %v1505 = vsel %vm1441, %v993, 0.0
    %v1506 = vsel %vm1442, %v994, 0.0
    %v1507 = vsel %vm1443, %v995, 0.0
    %v1508 = vsel %vm1444, %v996, 0.0
    %v1509 = vsel %vm1445, %v997, 0.0
    %v1510 = vsel %vm1446, %v998, 0.0
    %v1511 = vsel %vm1447, %v999, 0.0
    %v1512 = vsel %vm1448, %v1000, 0.0
    %v1513 = vsel %vm1449, %v1001, 0.0
    %v1514 = vsel %vm1450, %v1002, 0.0
    %v1515 = vsel %vm1451, %v1003, 0.0
    %v1516 = vsel %vm1452, %v1004, 0.0
    %v1517 = vsel %vm1453, %v1005, 0.0
    %v1518 = vsel %vm1454, %v1006, 0.0
    %v1519 = vsel %vm1455, %v1007, 0.0
    %v1520 = vsel %vm1456, %v1008, 0.0
    %v1521 = vsel %vm1457, %v1009, 0.0
    %v1522 = vsel %vm1458, %v1010, 0.0
    %v1523 = vsel %vm1459, %v1011, 0.0
    %v1524 = vsel %vm1460, %v1012, 0.0
    %v1525 = vsel %vm1461, %v1013, 0.0
    %v1526 = vsel %vm1462, %v1014, 0.0
    %v1527 = vsel %vm1463, %v1015, 0.0
    %v1528 = vsel %vm1464, %v1016, 0.0
    %v1529 = vsel %vm1465, %v1017, 0.0
    %v1530 = vsel %vm1466, %v1018, 0.0
    %v1531 = vsel %vm1467, %v1019, 0.0
    %v1532 = vsel %vm1468, %v1020, 0.0
    %v1533 = vsel %vm1469, %v1021, 0.0
    %v1534 = vsel %vm1470, %v1022, 0.0
    %v1535 = vsel %vm1471, %v1023, 0.0
    %v1536 = vsel %vm1472, %v1024, 0.0
    %v1537 = vsel %vm1473, %v1025, 0.0
    %v1538 = vsel %vm1474, %v1026, 0.0
    %v1539 = vsel %vm1475, %v1027, 0.0
    %v1540 = vsel %vm1476, %v1028, 0.0
    %v1541 = vsel %vm1477, %v1029, 0.0
    %v1542 = vsel %vm1478, %v1030, 0.0
    %v1543 = vsel %vm1479, %v1031, 0.0
    %v1544 = vsel %vm1480, %v1032, 0.0
    %v1545 = vsel %vm1481, %v1033, 0.0
    %v1546 = vsel %vm1482, %v1034, 0.0
    %v1547 = vsel %vm1483, %v1035, 0.0
    %v1548 = vsel %vm1484, %v1036, 0.0
    %v1549 = vsel %vm1485, %v1037, 0.0
    %v1550 = vsel %vm1486, %v1038, 0.0
    %v1551 = vsel %vm1487, %v1039, 0.0
    %v1552 = vsel %vm1488, %v1040, 0.0
    %v1553 = vsel %vm1489, %v1041, 0.0
    %v1554 = vsel %vm1490, %v1042, 0.0
    %v1555 = vsel %vm1491, %v1043, 0.0
    %v1556 = vsel %vm1492, %v1044, 0.0
    %v1557 = vsel %vm1493, %v1045, 0.0
    %v1558 = vmax.f32 %v1494, %v1498
    %v1559 = vmax.f32 %v1495, %v1499
    %v1560 = vmax.f32 %v1496, %v1500
    %v1561 = vmax.f32 %v1497, %v1501
    %v1562 = vmax.f32 %v1558, %v1502
    %v1563 = vmax.f32 %v1559, %v1503
    %v1564 = vmax.f32 %v1560, %v1504
    %v1565 = vmax.f32 %v1561, %v1505
    %v1566 = vmax.f32 %v1562, %v1506
    %v1567 = vmax.f32 %v1563, %v1507
    %v1568 = vmax.f32 %v1564, %v1508
    %v1569 = vmax.f32 %v1565, %v1509
    %v1570 = vmax.f32 %v1566, %v1510
    %v1571 = vmax.f32 %v1567, %v1511
    %v1572 = vmax.f32 %v1568, %v1512
    %v1573 = vmax.f32 %v1569, %v1513
    %v1574 = vmax.f32 %v1570, %v1514
    %v1575 = vmax.f32 %v1571, %v1515
    %v1576 = vmax.f32 %v1572, %v1516
    %v1577 = vmax.f32 %v1573, %v1517
    %v1578 = vmax.f32 %v1574, %v1518
    %v1579 = vmax.f32 %v1575, %v1519
    %v1580 = vmax.f32 %v1576, %v1520
    %v1581 = vmax.f32 %v1577, %v1521
    %v1582 = vmax.f32 %v1578, %v1522
    %v1583 = vmax.f32 %v1579, %v1523
    %v1584 = vmax.f32 %v1580, %v1524
    %v1585 = vmax.f32 %v1581, %v1525
    %v1586 = vmax.f32 %v1582, %v1526
    %v1587 = vmax.f32 %v1583, %v1527
    %v1588 = vmax.f32 %v1584, %v1528
    %v1589 = vmax.f32 %v1585, %v1529
    %v1590 = vmax.f32 %v1586, %v1530
    %v1591 = vmax.f32 %v1587, %v1531
    %v1592 = vmax.f32 %v1588, %v1532
    %v1593 = vmax.f32 %v1589, %v1533
    %v1594 = vmax.f32 %v1590, %v1534
    %v1595 = vmax.f32 %v1591, %v1535
    %v1596 = vmax.f32 %v1592, %v1536
    %v1597 = vmax.f32 %v1593, %v1537
    %v1598 = vmax.f32 %v1594, %v1538
    %v1599 = vmax.f32 %v1595, %v1539
    %v1600 = vmax.f32 %v1596, %v1540
    %v1601 = vmax.f32 %v1597, %v1541
    %v1602 = vmax.f32 %v1598, %v1542
    %v1603 = vmax.f32 %v1599, %v1543
    %v1604 = vmax.f32 %v1600, %v1544
    %v1605 = vmax.f32 %v1601, %v1545
    %v1606 = vmax.f32 %v1602, %v1546
    %v1607 = vmax.f32 %v1603, %v1547
    %v1608 = vmax.f32 %v1604, %v1548
    %v1609 = vmax.f32 %v1605, %v1549
    %v1610 = vmax.f32 %v1606, %v1550
    %v1611 = vmax.f32 %v1607, %v1551
    %v1612 = vmax.f32 %v1608, %v1552
    %v1613 = vmax.f32 %v1609, %v1553
    %v1614 = vmax.f32 %v1610, %v1554
    %v1615 = vmax.f32 %v1611, %v1555
    %v1616 = vmax.f32 %v1612, %v1556
    %v1617 = vmax.f32 %v1613, %v1557
    %v1618 = vmax.f32 %v1614, %v1615
    %v1619 = vmax.f32 %v1616, %v1617
    %v1620 = vmax.f32 %v1618, %v1619
    %v1621 = vrot.slane %v1620, 4
    %v1622 = vmax.f32 %v1620, %v1621
    %v1623 = vrot.slane %v1622, 2
    %v1624 = vmax.f32 %v1622, %v1623
    %v1625 = vrot.slane %v1624, 1
    %v1626 = vmax.f32 %v1624, %v1625
    %v1627 = vld [vmem:[#allocation2] sm:$0x1]
    %v1628 = vmax.f32 %v1627, %v1626
    %1629 = vst [vmem:[#allocation2] sm:$0x1] %v1628
    %vm1630 = vcmp.eq.s32.totalorder %v1046, 1
    %vm1631 = vcmp.eq.s32.totalorder %v1047, 1
    %vm1632 = vcmp.eq.s32.totalorder %v1048, 1
    %vm1633 = vcmp.eq.s32.totalorder %v1049, 1
    %vm1634 = vcmp.eq.s32.totalorder %v1050, 1
    %vm1635 = vcmp.eq.s32.totalorder %v1051, 1
    %vm1636 = vcmp.eq.s32.totalorder %v1052, 1
    %vm1637 = vcmp.eq.s32.totalorder %v1053, 1
    %vm1638 = vcmp.eq.s32.totalorder %v1054, 1
    %vm1639 = vcmp.eq.s32.totalorder %v1055, 1
    %vm1640 = vcmp.eq.s32.totalorder %v1056, 1
    %vm1641 = vcmp.eq.s32.totalorder %v1057, 1
    %vm1642 = vcmp.eq.s32.totalorder %v1058, 1
    %vm1643 = vcmp.eq.s32.totalorder %v1059, 1
    %vm1644 = vcmp.eq.s32.totalorder %v1060, 1
    %vm1645 = vcmp.eq.s32.totalorder %v1061, 1
    %vm1646 = vcmp.eq.s32.totalorder %v1062, 1
    %vm1647 = vcmp.eq.s32.totalorder %v1063, 1
    %vm1648 = vcmp.eq.s32.totalorder %v1064, 1
    %vm1649 = vcmp.eq.s32.totalorder %v1065, 1
    %vm1650 = vcmp.eq.s32.totalorder %v1066, 1
    %vm1651 = vcmp.eq.s32.totalorder %v1067, 1
    %vm1652 = vcmp.eq.s32.totalorder %v1068, 1
    %vm1653 = vcmp.eq.s32.totalorder %v1069, 1
    %vm1654 = vcmp.eq.s32.totalorder %v1070, 1
    %vm1655 = vcmp.eq.s32.totalorder %v1071, 1
    %vm1656 = vcmp.eq.s32.totalorder %v1072, 1
    %vm1657 = vcmp.eq.s32.totalorder %v1073, 1
    %vm1658 = vcmp.eq.s32.totalorder %v1074, 1
    %vm1659 = vcmp.eq.s32.totalorder %v1075, 1
    %vm1660 = vcmp.eq.s32.totalorder %v1076, 1
    %vm1661 = vcmp.eq.s32.totalorder %v1077, 1
    %vm1662 = vcmp.eq.s32.totalorder %v1078, 1
    %vm1663 = vcmp.eq.s32.totalorder %v1079, 1
    %vm1664 = vcmp.eq.s32.totalorder %v1080, 1
    %vm1665 = vcmp.eq.s32.totalorder %v1081, 1
    %vm1666 = vcmp.eq.s32.totalorder %v1082, 1
    %vm1667 = vcmp.eq.s32.totalorder %v1083, 1
    %vm1668 = vcmp.eq.s32.totalorder %v1084, 1
    %vm1669 = vcmp.eq.s32.totalorder %v1085, 1
    %vm1670 = vcmp.eq.s32.totalorder %v1086, 1
    %vm1671 = vcmp.eq.s32.totalorder %v1087, 1
    %vm1672 = vcmp.eq.s32.totalorder %v1088, 1
    %vm1673 = vcmp.eq.s32.totalorder %v1089, 1
    %vm1674 = vcmp.eq.s32.totalorder %v1090, 1
    %vm1675 = vcmp.eq.s32.totalorder %v1091, 1
    %vm1676 = vcmp.eq.s32.totalorder %v1092, 1
    %vm1677 = vcmp.eq.s32.totalorder %v1093, 1
    %vm1678 = vcmp.eq.s32.totalorder %v1094, 1
    %vm1679 = vcmp.eq.s32.totalorder %v1095, 1
    %vm1680 = vcmp.eq.s32.totalorder %v1096, 1
    %vm1681 = vcmp.eq.s32.totalorder %v1097, 1
    %vm1682 = vcmp.eq.s32.totalorder %v1098, 1
    %vm1683 = vcmp.eq.s32.totalorder %v1099, 1
    %vm1684 = vcmp.eq.s32.totalorder %v1100, 1
    %vm1685 = vcmp.eq.s32.totalorder %v1101, 1
    %vm1686 = vcmp.eq.s32.totalorder %v1102, 1
    %vm1687 = vcmp.eq.s32.totalorder %v1103, 1
    %vm1688 = vcmp.eq.s32.totalorder %v1104, 1
    %vm1689 = vcmp.eq.s32.totalorder %v1105, 1
    %vm1690 = vcmp.eq.s32.totalorder %v1106, 1
    %vm1691 = vcmp.eq.s32.totalorder %v1107, 1
    %vm1692 = vcmp.eq.s32.totalorder %v1108, 1
    %vm1693 = vcmp.eq.s32.totalorder %v1109, 1
    %v1694 = vsel %vm1630, 1, 0
    %v1695 = vsel %vm1631, 1, 0
    %v1696 = vsel %vm1632, 1, 0
    %v1697 = vsel %vm1633, 1, 0
    %v1698 = vsel %vm1634, 1, 0
    %v1699 = vsel %vm1635, 1, 0
    %v1700 = vsel %vm1636, 1, 0
    %v1701 = vsel %vm1637, 1, 0
    %v1702 = vsel %vm1638, 1, 0
    %v1703 = vsel %vm1639, 1, 0
    %v1704 = vsel %vm1640, 1, 0
    %v1705 = vsel %vm1641, 1, 0
    %v1706 = vsel %vm1642, 1, 0
    %v1707 = vsel %vm1643, 1, 0
    %v1708 = vsel %vm1644, 1, 0
    %v1709 = vsel %vm1645, 1, 0
    %v1710 = vsel %vm1646, 1, 0
    %v1711 = vsel %vm1647, 1, 0
    %v1712 = vsel %vm1648, 1, 0
    %v1713 = vsel %vm1649, 1, 0
    %v1714 = vsel %vm1650, 1, 0
    %v1715 = vsel %vm1651, 1, 0
    %v1716 = vsel %vm1652, 1, 0
    %v1717 = vsel %vm1653, 1, 0
    %v1718 = vsel %vm1654, 1, 0
    %v1719 = vsel %vm1655, 1, 0
    %v1720 = vsel %vm1656, 1, 0
    %v1721 = vsel %vm1657, 1, 0
    %v1722 = vsel %vm1658, 1, 0
    %v1723 = vsel %vm1659, 1, 0
    %v1724 = vsel %vm1660, 1, 0
    %v1725 = vsel %vm1661, 1, 0
    %v1726 = vsel %vm1662, 1, 0
    %v1727 = vsel %vm1663, 1, 0
    %v1728 = vsel %vm1664, 1, 0
    %v1729 = vsel %vm1665, 1, 0
    %v1730 = vsel %vm1666, 1, 0
    %v1731 = vsel %vm1667, 1, 0
    %v1732 = vsel %vm1668, 1, 0
    %v1733 = vsel %vm1669, 1, 0
    %v1734 = vsel %vm1670, 1, 0
    %v1735 = vsel %vm1671, 1, 0
    %v1736 = vsel %vm1672, 1, 0
    %v1737 = vsel %vm1673, 1, 0
    %v1738 = vsel %vm1674, 1, 0
    %v1739 = vsel %vm1675, 1, 0
    %v1740 = vsel %vm1676, 1, 0
    %v1741 = vsel %vm1677, 1, 0
    %v1742 = vsel %vm1678, 1, 0
    %v1743 = vsel %vm1679, 1, 0
    %v1744 = vsel %vm1680, 1, 0
    %v1745 = vsel %vm1681, 1, 0
    %v1746 = vsel %vm1682, 1, 0
    %v1747 = vsel %vm1683, 1, 0
    %v1748 = vsel %vm1684, 1, 0
    %v1749 = vsel %vm1685, 1, 0
    %v1750 = vsel %vm1686, 1, 0
    %v1751 = vsel %vm1687, 1, 0
    %v1752 = vsel %vm1688, 1, 0
    %v1753 = vsel %vm1689, 1, 0
    %v1754 = vsel %vm1690, 1, 0
    %v1755 = vsel %vm1691, 1, 0
    %v1756 = vsel %vm1692, 1, 0
    %v1757 = vsel %vm1693, 1, 0
    %1758 = vset.pattern.permute.xlu0 0
    %1759 = vperm.xlu0 %1758, %v1694
    %v1760 = vpop.permute.xlu0 %1759
    %1761 = vset.pattern.permute.xlu0 0
    %1762 = vperm.xlu0 %1761, %v1695
    %v1763 = vpop.permute.xlu0 %1762
    %1764 = vset.pattern.permute.xlu0 0
    %1765 = vperm.xlu0 %1764, %v1696
    %v1766 = vpop.permute.xlu0 %1765
    %1767 = vset.pattern.permute.xlu0 0
    %1768 = vperm.xlu0 %1767, %v1697
    %v1769 = vpop.permute.xlu0 %1768
    %1770 = vset.pattern.permute.xlu0 0
    %1771 = vperm.xlu0 %1770, %v1698
    %v1772 = vpop.permute.xlu0 %1771
    %1773 = vset.pattern.permute.xlu0 0
    %1774 = vperm.xlu0 %1773, %v1699
    %v1775 = vpop.permute.xlu0 %1774
    %1776 = vset.pattern.permute.xlu0 0
    %1777 = vperm.xlu0 %1776, %v1700
    %v1778 = vpop.permute.xlu0 %1777
    %1779 = vset.pattern.permute.xlu0 0
    %1780 = vperm.xlu0 %1779, %v1701
    %v1781 = vpop.permute.xlu0 %1780
    %1782 = vset.pattern.permute.xlu0 0
    %1783 = vperm.xlu0 %1782, %v1702
    %v1784 = vpop.permute.xlu0 %1783
    %1785 = vset.pattern.permute.xlu0 0
    %1786 = vperm.xlu0 %1785, %v1703
    %v1787 = vpop.permute.xlu0 %1786
    %1788 = vset.pattern.permute.xlu0 0
    %1789 = vperm.xlu0 %1788, %v1704
    %v1790 = vpop.permute.xlu0 %1789
    %1791 = vset.pattern.permute.xlu0 0
    %1792 = vperm.xlu0 %1791, %v1705
    %v1793 = vpop.permute.xlu0 %1792
    %1794 = vset.pattern.permute.xlu0 0
    %1795 = vperm.xlu0 %1794, %v1706
    %v1796 = vpop.permute.xlu0 %1795
    %1797 = vset.pattern.permute.xlu0 0
    %1798 = vperm.xlu0 %1797, %v1707
    %v1799 = vpop.permute.xlu0 %1798
    %1800 = vset.pattern.permute.xlu0 0
    %1801 = vperm.xlu0 %1800, %v1708
    %v1802 = vpop.permute.xlu0 %1801
    %1803 = vset.pattern.permute.xlu0 0
    %1804 = vperm.xlu0 %1803, %v1709
    %v1805 = vpop.permute.xlu0 %1804
    %1806 = vset.pattern.permute.xlu0 0
    %1807 = vperm.xlu0 %1806, %v1710
    %v1808 = vpop.permute.xlu0 %1807
    %1809 = vset.pattern.permute.xlu0 0
    %1810 = vperm.xlu0 %1809, %v1711
    %v1811 = vpop.permute.xlu0 %1810
    %1812 = vset.pattern.permute.xlu0 0
    %1813 = vperm.xlu0 %1812, %v1712
    %v1814 = vpop.permute.xlu0 %1813
    %1815 = vset.pattern.permute.xlu0 0
    %1816 = vperm.xlu0 %1815, %v1713
    %v1817 = vpop.permute.xlu0 %1816
    %1818 = vset.pattern.permute.xlu0 0
    %1819 = vperm.xlu0 %1818, %v1714
    %v1820 = vpop.permute.xlu0 %1819
    %1821 = vset.pattern.permute.xlu0 0
    %1822 = vperm.xlu0 %1821, %v1715
    %v1823 = vpop.permute.xlu0 %1822
    %1824 = vset.pattern.permute.xlu0 0
    %1825 = vperm.xlu0 %1824, %v1716
    %v1826 = vpop.permute.xlu0 %1825
    %1827 = vset.pattern.permute.xlu0 0
    %1828 = vperm.xlu0 %1827, %v1717
    %v1829 = vpop.permute.xlu0 %1828
    %1830 = vset.pattern.permute.xlu0 0
    %1831 = vperm.xlu0 %1830, %v1718
    %v1832 = vpop.permute.xlu0 %1831
    %1833 = vset.pattern.permute.xlu0 0
    %1834 = vperm.xlu0 %1833, %v1719
    %v1835 = vpop.permute.xlu0 %1834
    %1836 = vset.pattern.permute.xlu0 0
    %1837 = vperm.xlu0 %1836, %v1720
    %v1838 = vpop.permute.xlu0 %1837
    %1839 = vset.pattern.permute.xlu0 0
    %1840 = vperm.xlu0 %1839, %v1721
    %v1841 = vpop.permute.xlu0 %1840
    %1842 = vset.pattern.permute.xlu0 0
    %1843 = vperm.xlu0 %1842, %v1722
    %v1844 = vpop.permute.xlu0 %1843
    %1845 = vset.pattern.permute.xlu0 0
    %1846 = vperm.xlu0 %1845, %v1723
    %v1847 = vpop.permute.xlu0 %1846
    %1848 = vset.pattern.permute.xlu0 0
    %1849 = vperm.xlu0 %1848, %v1724
    %v1850 = vpop.permute.xlu0 %1849
    %1851 = vset.pattern.permute.xlu0 0
    %1852 = vperm.xlu0 %1851, %v1725
    %v1853 = vpop.permute.xlu0 %1852
    %1854 = vset.pattern.permute.xlu0 0
    %1855 = vperm.xlu0 %1854, %v1726
    %v1856 = vpop.permute.xlu0 %1855
    %1857 = vset.pattern.permute.xlu0 0
    %1858 = vperm.xlu0 %1857, %v1727
    %v1859 = vpop.permute.xlu0 %1858
    %1860 = vset.pattern.permute.xlu0 0
    %1861 = vperm.xlu0 %1860, %v1728
    %v1862 = vpop.permute.xlu0 %1861
    %1863 = vset.pattern.permute.xlu0 0
    %1864 = vperm.xlu0 %1863, %v1729
    %v1865 = vpop.permute.xlu0 %1864
    %1866 = vset.pattern.permute.xlu0 0
    %1867 = vperm.xlu0 %1866, %v1730
    %v1868 = vpop.permute.xlu0 %1867
    %1869 = vset.pattern.permute.xlu0 0
    %1870 = vperm.xlu0 %1869, %v1731
    %v1871 = vpop.permute.xlu0 %1870
    %1872 = vset.pattern.permute.xlu0 0
    %1873 = vperm.xlu0 %1872, %v1732
    %v1874 = vpop.permute.xlu0 %1873
    %1875 = vset.pattern.permute.xlu0 0
    %1876 = vperm.xlu0 %1875, %v1733
    %v1877 = vpop.permute.xlu0 %1876
    %1878 = vset.pattern.permute.xlu0 0
    %1879 = vperm.xlu0 %1878, %v1734
    %v1880 = vpop.permute.xlu0 %1879
    %1881 = vset.pattern.permute.xlu0 0
    %1882 = vperm.xlu0 %1881, %v1735
    %v1883 = vpop.permute.xlu0 %1882
    %1884 = vset.pattern.permute.xlu0 0
    %1885 = vperm.xlu0 %1884, %v1736
    %v1886 = vpop.permute.xlu0 %1885
    %1887 = vset.pattern.permute.xlu0 0
    %1888 = vperm.xlu0 %1887, %v1737
    %v1889 = vpop.permute.xlu0 %1888
    %1890 = vset.pattern.permute.xlu0 0
    %1891 = vperm.xlu0 %1890, %v1738
    %v1892 = vpop.permute.xlu0 %1891
    %1893 = vset.pattern.permute.xlu0 0
    %1894 = vperm.xlu0 %1893, %v1739
    %v1895 = vpop.permute.xlu0 %1894
    %1896 = vset.pattern.permute.xlu0 0
    %1897 = vperm.xlu0 %1896, %v1740
    %v1898 = vpop.permute.xlu0 %1897
    %1899 = vset.pattern.permute.xlu0 0
    %1900 = vperm.xlu0 %1899, %v1741
    %v1901 = vpop.permute.xlu0 %1900
    %1902 = vset.pattern.permute.xlu0 0
    %1903 = vperm.xlu0 %1902, %v1742
    %v1904 = vpop.permute.xlu0 %1903
    %1905 = vset.pattern.permute.xlu0 0
    %1906 = vperm.xlu0 %1905, %v1743
    %v1907 = vpop.permute.xlu0 %1906
    %1908 = vset.pattern.permute.xlu0 0
    %1909 = vperm.xlu0 %1908, %v1744
    %v1910 = vpop.permute.xlu0 %1909
    %1911 = vset.pattern.permute.xlu0 0
    %1912 = vperm.xlu0 %1911, %v1745
    %v1913 = vpop.permute.xlu0 %1912
    %1914 = vset.pattern.permute.xlu0 0
    %1915 = vperm.xlu0 %1914, %v1746
    %v1916 = vpop.permute.xlu0 %1915
    %1917 = vset.pattern.permute.xlu0 0
    %1918 = vperm.xlu0 %1917, %v1747
    %v1919 = vpop.permute.xlu0 %1918
    %1920 = vset.pattern.permute.xlu0 0
    %1921 = vperm.xlu0 %1920, %v1748
    %v1922 = vpop.permute.xlu0 %1921
    %1923 = vset.pattern.permute.xlu0 0
    %1924 = vperm.xlu0 %1923, %v1749
    %v1925 = vpop.permute.xlu0 %1924
    %1926 = vset.pattern.permute.xlu0 0
    %1927 = vperm.xlu0 %1926, %v1750
    %v1928 = vpop.permute.xlu0 %1927
    %1929 = vset.pattern.permute.xlu0 0
    %1930 = vperm.xlu0 %1929, %v1751
    %v1931 = vpop.permute.xlu0 %1930
    %1932 = vset.pattern.permute.xlu0 0
    %1933 = vperm.xlu0 %1932, %v1752
    %v1934 = vpop.permute.xlu0 %1933
    %1935 = vset.pattern.permute.xlu0 0
    %1936 = vperm.xlu0 %1935, %v1753
    %v1937 = vpop.permute.xlu0 %1936
    %1938 = vset.pattern.permute.xlu0 0
    %1939 = vperm.xlu0 %1938, %v1754
    %v1940 = vpop.permute.xlu0 %1939
    %1941 = vset.pattern.permute.xlu0 0
    %1942 = vperm.xlu0 %1941, %v1755
    %v1943 = vpop.permute.xlu0 %1942
    %1944 = vset.pattern.permute.xlu0 0
    %1945 = vperm.xlu0 %1944, %v1756
    %v1946 = vpop.permute.xlu0 %1945
    %1947 = vset.pattern.permute.xlu0 0
    %1948 = vperm.xlu0 %1947, %v1757
    %v1949 = vpop.permute.xlu0 %1948
    %vm1950 = vcmp.eq.s32.totalorder %v1760, 1
    %vm1951 = vcmp.eq.s32.totalorder %v1763, 1
    %vm1952 = vcmp.eq.s32.totalorder %v1766, 1
    %vm1953 = vcmp.eq.s32.totalorder %v1769, 1
    %vm1954 = vcmp.eq.s32.totalorder %v1772, 1
    %vm1955 = vcmp.eq.s32.totalorder %v1775, 1
    %vm1956 = vcmp.eq.s32.totalorder %v1778, 1
    %vm1957 = vcmp.eq.s32.totalorder %v1781, 1
    %vm1958 = vcmp.eq.s32.totalorder %v1784, 1
    %vm1959 = vcmp.eq.s32.totalorder %v1787, 1
    %vm1960 = vcmp.eq.s32.totalorder %v1790, 1
    %vm1961 = vcmp.eq.s32.totalorder %v1793, 1
    %vm1962 = vcmp.eq.s32.totalorder %v1796, 1
    %vm1963 = vcmp.eq.s32.totalorder %v1799, 1
    %vm1964 = vcmp.eq.s32.totalorder %v1802, 1
    %vm1965 = vcmp.eq.s32.totalorder %v1805, 1
    %vm1966 = vcmp.eq.s32.totalorder %v1808, 1
    %vm1967 = vcmp.eq.s32.totalorder %v1811, 1
    %vm1968 = vcmp.eq.s32.totalorder %v1814, 1
    %vm1969 = vcmp.eq.s32.totalorder %v1817, 1
    %vm1970 = vcmp.eq.s32.totalorder %v1820, 1
    %vm1971 = vcmp.eq.s32.totalorder %v1823, 1
    %vm1972 = vcmp.eq.s32.totalorder %v1826, 1
    %vm1973 = vcmp.eq.s32.totalorder %v1829, 1
    %vm1974 = vcmp.eq.s32.totalorder %v1832, 1
    %vm1975 = vcmp.eq.s32.totalorder %v1835, 1
    %vm1976 = vcmp.eq.s32.totalorder %v1838, 1
    %vm1977 = vcmp.eq.s32.totalorder %v1841, 1
    %vm1978 = vcmp.eq.s32.totalorder %v1844, 1
    %vm1979 = vcmp.eq.s32.totalorder %v1847, 1
    %vm1980 = vcmp.eq.s32.totalorder %v1850, 1
    %vm1981 = vcmp.eq.s32.totalorder %v1853, 1
    %vm1982 = vcmp.eq.s32.totalorder %v1856, 1
    %vm1983 = vcmp.eq.s32.totalorder %v1859, 1
    %vm1984 = vcmp.eq.s32.totalorder %v1862, 1
    %vm1985 = vcmp.eq.s32.totalorder %v1865, 1
    %vm1986 = vcmp.eq.s32.totalorder %v1868, 1
    %vm1987 = vcmp.eq.s32.totalorder %v1871, 1
    %vm1988 = vcmp.eq.s32.totalorder %v1874, 1
    %vm1989 = vcmp.eq.s32.totalorder %v1877, 1
    %vm1990 = vcmp.eq.s32.totalorder %v1880, 1
    %vm1991 = vcmp.eq.s32.totalorder %v1883, 1
    %vm1992 = vcmp.eq.s32.totalorder %v1886, 1
    %vm1993 = vcmp.eq.s32.totalorder %v1889, 1
    %vm1994 = vcmp.eq.s32.totalorder %v1892, 1
    %vm1995 = vcmp.eq.s32.totalorder %v1895, 1
    %vm1996 = vcmp.eq.s32.totalorder %v1898, 1
    %vm1997 = vcmp.eq.s32.totalorder %v1901, 1
    %vm1998 = vcmp.eq.s32.totalorder %v1904, 1
    %vm1999 = vcmp.eq.s32.totalorder %v1907, 1
    %vm2000 = vcmp.eq.s32.totalorder %v1910, 1
    %vm2001 = vcmp.eq.s32.totalorder %v1913, 1
    %vm2002 = vcmp.eq.s32.totalorder %v1916, 1
    %vm2003 = vcmp.eq.s32.totalorder %v1919, 1
    %vm2004 = vcmp.eq.s32.totalorder %v1922, 1
    %vm2005 = vcmp.eq.s32.totalorder %v1925, 1
    %vm2006 = vcmp.eq.s32.totalorder %v1928, 1
    %vm2007 = vcmp.eq.s32.totalorder %v1931, 1
    %vm2008 = vcmp.eq.s32.totalorder %v1934, 1
    %vm2009 = vcmp.eq.s32.totalorder %v1937, 1
    %vm2010 = vcmp.eq.s32.totalorder %v1940, 1
    %vm2011 = vcmp.eq.s32.totalorder %v1943, 1
    %vm2012 = vcmp.eq.s32.totalorder %v1946, 1
    %vm2013 = vcmp.eq.s32.totalorder %v1949, 1
    %v2014 = vsel %vm1950, %v982, 0.0
    %v2015 = vsel %vm1951, %v983, 0.0
    %v2016 = vsel %vm1952, %v984, 0.0
    %v2017 = vsel %vm1953, %v985, 0.0
    %v2018 = vsel %vm1954, %v986, 0.0
    %v2019 = vsel %vm1955, %v987, 0.0
    %v2020 = vsel %vm1956, %v988, 0.0
    %v2021 = vsel %vm1957, %v989, 0.0
    %v2022 = vsel %vm1958, %v990, 0.0
    %v2023 = vsel %vm1959, %v991, 0.0
    %v2024 = vsel %vm1960, %v992, 0.0
    %v2025 = vsel %vm1961, %v993, 0.0
    %v2026 = vsel %vm1962, %v994, 0.0
    %v2027 = vsel %vm1963, %v995, 0.0
    %v2028 = vsel %vm1964, %v996, 0.0
    %v2029 = vsel %vm1965, %v997, 0.0
    %v2030 = vsel %vm1966, %v998, 0.0
    %v2031 = vsel %vm1967, %v999, 0.0
    %v2032 = vsel %vm1968, %v1000, 0.0
    %v2033 = vsel %vm1969, %v1001, 0.0
    %v2034 = vsel %vm1970, %v1002, 0.0
    %v2035 = vsel %vm1971, %v1003, 0.0
    %v2036 = vsel %vm1972, %v1004, 0.0
    %v2037 = vsel %vm1973, %v1005, 0.0
    %v2038 = vsel %vm1974, %v1006, 0.0
    %v2039 = vsel %vm1975, %v1007, 0.0
    %v2040 = vsel %vm1976, %v1008, 0.0
    %v2041 = vsel %vm1977, %v1009, 0.0
    %v2042 = vsel %vm1978, %v1010, 0.0
    %v2043 = vsel %vm1979, %v1011, 0.0
    %v2044 = vsel %vm1980, %v1012, 0.0
    %v2045 = vsel %vm1981, %v1013, 0.0
    %v2046 = vsel %vm1982, %v1014, 0.0
    %v2047 = vsel %vm1983, %v1015, 0.0
    %v2048 = vsel %vm1984, %v1016, 0.0
    %v2049 = vsel %vm1985, %v1017, 0.0
    %v2050 = vsel %vm1986, %v1018, 0.0
    %v2051 = vsel %vm1987, %v1019, 0.0
    %v2052 = vsel %vm1988, %v1020, 0.0
    %v2053 = vsel %vm1989, %v1021, 0.0
    %v2054 = vsel %vm1990, %v1022, 0.0
    %v2055 = vsel %vm1991, %v1023, 0.0
    %v2056 = vsel %vm1992, %v1024, 0.0
    %v2057 = vsel %vm1993, %v1025, 0.0
    %v2058 = vsel %vm1994, %v1026, 0.0
    %v2059 = vsel %vm1995, %v1027, 0.0
    %v2060 = vsel %vm1996, %v1028, 0.0
    %v2061 = vsel %vm1997, %v1029, 0.0
    %v2062 = vsel %vm1998, %v1030, 0.0
    %v2063 = vsel %vm1999, %v1031, 0.0
    %v2064 = vsel %vm2000, %v1032, 0.0
    %v2065 = vsel %vm2001, %v1033, 0.0
    %v2066 = vsel %vm2002, %v1034, 0.0
    %v2067 = vsel %vm2003, %v1035, 0.0
    %v2068 = vsel %vm2004, %v1036, 0.0
    %v2069 = vsel %vm2005, %v1037, 0.0
    %v2070 = vsel %vm2006, %v1038, 0.0
    %v2071 = vsel %vm2007, %v1039, 0.0
    %v2072 = vsel %vm2008, %v1040, 0.0
    %v2073 = vsel %vm2009, %v1041, 0.0
    %v2074 = vsel %vm2010, %v1042, 0.0
    %v2075 = vsel %vm2011, %v1043, 0.0
    %v2076 = vsel %vm2012, %v1044, 0.0
    %v2077 = vsel %vm2013, %v1045, 0.0
    %v2078 = vmax.f32 %v2014, %v2018
    %v2079 = vmax.f32 %v2015, %v2019
    %v2080 = vmax.f32 %v2016, %v2020
    %v2081 = vmax.f32 %v2017, %v2021
    %v2082 = vmax.f32 %v2078, %v2022
    %v2083 = vmax.f32 %v2079, %v2023
    %v2084 = vmax.f32 %v2080, %v2024
    %v2085 = vmax.f32 %v2081, %v2025
    %v2086 = vmax.f32 %v2082, %v2026
    %v2087 = vmax.f32 %v2083, %v2027
    %v2088 = vmax.f32 %v2084, %v2028
    %v2089 = vmax.f32 %v2085, %v2029
    %v2090 = vmax.f32 %v2086, %v2030
    %v2091 = vmax.f32 %v2087, %v2031
    %v2092 = vmax.f32 %v2088, %v2032
    %v2093 = vmax.f32 %v2089, %v2033
    %v2094 = vmax.f32 %v2090, %v2034
    %v2095 = vmax.f32 %v2091, %v2035
    %v2096 = vmax.f32 %v2092, %v2036
    %v2097 = vmax.f32 %v2093, %v2037
    %v2098 = vmax.f32 %v2094, %v2038
    %v2099 = vmax.f32 %v2095, %v2039
    %v2100 = vmax.f32 %v2096, %v2040
    %v2101 = vmax.f32 %v2097, %v2041
    %v2102 = vmax.f32 %v2098, %v2042
    %v2103 = vmax.f32 %v2099, %v2043
    %v2104 = vmax.f32 %v2100, %v2044
    %v2105 = vmax.f32 %v2101, %v2045
    %v2106 = vmax.f32 %v2102, %v2046
    %v2107 = vmax.f32 %v2103, %v2047
    %v2108 = vmax.f32 %v2104, %v2048
    %v2109 = vmax.f32 %v2105, %v2049
    %v2110 = vmax.f32 %v2106, %v2050
    %v2111 = vmax.f32 %v2107, %v2051
    %v2112 = vmax.f32 %v2108, %v2052
    %v2113 = vmax.f32 %v2109, %v2053
    %v2114 = vmax.f32 %v2110, %v2054
    %v2115 = vmax.f32 %v2111, %v2055
    %v2116 = vmax.f32 %v2112, %v2056
    %v2117 = vmax.f32 %v2113, %v2057
    %v2118 = vmax.f32 %v2114, %v2058
    %v2119 = vmax.f32 %v2115, %v2059
    %v2120 = vmax.f32 %v2116, %v2060
    %v2121 = vmax.f32 %v2117, %v2061
    %v2122 = vmax.f32 %v2118, %v2062
    %v2123 = vmax.f32 %v2119, %v2063
    %v2124 = vmax.f32 %v2120, %v2064
    %v2125 = vmax.f32 %v2121, %v2065
    %v2126 = vmax.f32 %v2122, %v2066
    %v2127 = vmax.f32 %v2123, %v2067
    %v2128 = vmax.f32 %v2124, %v2068
    %v2129 = vmax.f32 %v2125, %v2069
    %v2130 = vmax.f32 %v2126, %v2070
    %v2131 = vmax.f32 %v2127, %v2071
    %v2132 = vmax.f32 %v2128, %v2072
    %v2133 = vmax.f32 %v2129, %v2073
    %v2134 = vmax.f32 %v2130, %v2074
    %v2135 = vmax.f32 %v2131, %v2075
    %v2136 = vmax.f32 %v2132, %v2076
    %v2137 = vmax.f32 %v2133, %v2077
    %v2138 = vmax.f32 %v2134, %v2135
    %v2139 = vmax.f32 %v2136, %v2137
    %v2140 = vmax.f32 %v2138, %v2139
    %v2141 = vrot.slane %v2140, 4
    %v2142 = vmax.f32 %v2140, %v2141
    %v2143 = vrot.slane %v2142, 2
    %v2144 = vmax.f32 %v2142, %v2143
    %v2145 = vrot.slane %v2144, 1
    %v2146 = vmax.f32 %v2144, %v2145
    %v2147 = vld [vmem:[#allocation2 + $0x1] sm:$0x1]
    %v2148 = vmax.f32 %v2147, %v2146
    %2149 = vst [vmem:[#allocation2 + $0x1] sm:$0x1] %v2148
    // Predicated region
    $region30: #{tpu_custom_call.1} parent=1 // pred_check
      _
    $region31: #{tpu_custom_call.1} parent=1 // pred_check_branch
      %2151 = sbr.rel (0) target = $region33
    $region32: #{tpu_custom_call.1} parent=1 // pred_region
      %2153 = vsyncadd [#allocation3], 0
      %s2155 = sshll.u32 [#allocation2], 4
      %s2156 = int_to_ptr.vmem [resolvable:$true] %s2155
      %s2157 = sshll.u32 %s6, 4
      %s2158 = int_to_ptr.hbm [resolvable:$true] %s2157
      %2160 = dma.vmem_to_hbm [thread:$0]  %s2156, 128, %s2158, [#allocation3]
    $region33: #{tpu_custom_call.1} parent=1 // pred_fallthru
      _
    // Predicated region
    $region34: #{tpu_custom_call.1} parent=1 // pred_check
      _
    $region35: #{tpu_custom_call.1} parent=1 // pred_check_branch
      %2162 = sbr.rel (0) target = $region37
    $region36: #{tpu_custom_call.1} parent=1 // pred_region
      %2164 = dma.done [#allocation3], 128
    $region37: #{tpu_custom_call.1} parent=1 // pred_fallthru
      _
    %2165 = vsyncpa [#allocation3], 1

</llo_original>
